<compile_context>
chip_gen: v6e
topology: v6e:2x2x1
jax: 0.10.0
libtpu: 0.0.40
codegen_flags: <defaults>
</compile_context>

<pallas_src>
import functools
import math

import jax
import jax.numpy as jnp
from jax.experimental import pallas as pl
from jax.experimental.pallas import tpu as pltpu


def _round_up(x, m):
    return ((x + m - 1) // m) * m


# --------------------------------------------------------------------------
# GELU variants built only from VPU/EUP-friendly ops.
# --------------------------------------------------------------------------
_SQRT_2_OVER_PI = math.sqrt(2.0 / math.pi)
_INV_SQRT2 = 1.0 / math.sqrt(2.0)


def _gelu_tanh(x):
    # tanh-approx GELU; jnp.tanh lowers to the EUP slot (free next to VALU/MXU work).
    return 0.5 * x * (1.0 + jnp.tanh(_SQRT_2_OVER_PI * (x + 0.044715 * (x * x * x))))


def _erf(z):
    # Abramowitz & Stegun 7.1.26, |err| < 1.5e-7; divide routed to the EUP (vrcp).
    a1, a2, a3, a4, a5 = 0.254829592, -0.284496736, 1.421413741, -1.453152027, 1.061405429
    p = 0.3275911
    sgn = jnp.where(z >= 0.0, 1.0, -1.0)
    za = jnp.abs(z)
    t = pl.reciprocal(1.0 + p * za, approx=True)
    poly = ((((a5 * t + a4) * t + a3) * t + a2) * t + a1) * t
    return sgn * (1.0 - poly * jnp.exp(-(za * za)))


def _gelu_exact(x):
    return 0.5 * x * (1.0 + _erf(x * _INV_SQRT2))


# --------------------------------------------------------------------------
# Fused MLP kernel:  y = GELU(x @ W1 + b1) @ W2 + b2   (dropout p=0 -> identity)
#   grid = (row tiles [parallel], hidden-dim chunks [arbitrary, last])
# --------------------------------------------------------------------------
def _mlp_kernel(x_ref, w1_ref, b1_ref, w2_ref, b2_ref, o_ref, acc_ref, *, exact_gelu):
    k = pl.program_id(1)

    @pl.when(k == 0)
    def _():
        acc_ref[...] = jnp.zeros_like(acc_ref)

    # (tm, Cin) @ (Cin, tch) on the MXU, bf16 x bf16 -> f32 accumulation.
    h = jnp.dot(x_ref[...], w1_ref[...], preferred_element_type=jnp.float32)
    h = h + b1_ref[...]
    h = _gelu_exact(h) if exact_gelu else _gelu_tanh(h)

    # (tm, tch) @ (tch, Cout) accumulated into the output-resident f32 scratch.
    acc_ref[...] += jnp.dot(h.astype(w2_ref.dtype), w2_ref[...],
                            preferred_element_type=jnp.float32)

    @pl.when(k == pl.num_programs(1) - 1)
    def _():
        o_ref[...] = (acc_ref[...] + b2_ref[...]).astype(o_ref.dtype)


def _vmem_capacity_bytes():
    try:
        return int(pltpu.get_tpu_info().vmem_capacity_bytes)
    except Exception:
        return 64 << 20   # conservative fallback (v7x per-TensorCore VMEM)


def mlp_forward(x, params, *, drop=0.0, tm=256, tch=512,
                compute_dtype=jnp.bfloat16, exact_gelu=False):
    """Forward pass of `Mlp`. x: (..., Cin); params hold torch-layout fc weights/biases."""
    if drop != 0.0:
        # TODO(synk): training-mode dropout would need pltpu.prng_seed/prng_random_bits.
        raise NotImplementedError("Only drop=0.0 (inference / identity dropout) is supported.")

    orig_shape = x.shape
    Cin = orig_shape[-1]
    x2 = x.reshape(-1, Cin)
    M = x2.shape[0]
    out_dtype = x.dtype

    w1, b1 = params["fc1_w"], params["fc1_b"]       # (Ch, Cin), (Ch,)
    w2, b2 = params["fc2_w"], params["fc2_b"]       # (Cout, Ch), (Cout,)
    Ch, Cout = w1.shape[0], w2.shape[0]

    # ---- lane-dense channel padding (multiples of 128) ----
    Cin_p = _round_up(Cin, 128)
    Cout_p = _round_up(Cout, 128)
    tch = _round_up(min(tch, _round_up(Ch, 128)), 128)   # hidden chunk, lane multiple
    Ch_p = _round_up(Ch, tch)                            # pad Ch so tch divides it

    # ---- row tiling: sublane-aligned, >=2 grid steps when M allows (megacore) ----
    M8 = _round_up(M, 8)
    tm = max(8, min(tm, _round_up(-(-M8 // 2), 8), M8))
    M_pad = _round_up(M, tm)

    # ---- parameter / input plumbing (wrapper glue; pads + casts fuse in XLA) ----
    w1_t = jnp.pad(w1.T.astype(compute_dtype), ((0, Cin_p - Cin), (0, Ch_p - Ch)))
    w2_t = jnp.pad(w2.T.astype(compute_dtype), ((0, Ch_p - Ch), (0, Cout_p - Cout)))
    b1_r = jnp.pad(b1.astype(jnp.float32), (0, Ch_p - Ch)).reshape(1, Ch_p)
    b2_r = jnp.pad(b2.astype(jnp.float32), (0, Cout_p - Cout)).reshape(1, Cout_p)
    # bf16 activations: the cast fuses with the padding copy (no standalone cast pass).
    x2 = jnp.pad(x2.astype(compute_dtype), ((0, M_pad - M), (0, Cin_p - Cin)))

    grid = (M_pad // tm, Ch_p // tch)

    # ---- VMEM demand (real buffering) and generation-aware limit ----
    wb = jnp.dtype(compute_dtype).itemsize
    ob = jnp.dtype(out_dtype).itemsize
    demand = (2 * tm * Cin_p * wb          # x tile, double-buffered
              + 2 * tm * Cout_p * ob       # out tile, double-buffered
              + 2 * Cin_p * tch * wb       # w1 chunk, double-buffered (overlaps compute)
              + 2 * tch * Cout_p * wb      # w2 chunk, double-buffered
              + 2 * 8 * tch * 4            # b1 chunk (sublane-padded to 8 rows)
              + 2 * 8 * Cout_p * 4         # b2
              + tm * Cout_p * 4            # f32 accumulator scratch
              + 2 * tm * tch * 4)          # in-kernel hidden temporaries
    cap = _vmem_capacity_bytes()
    ceiling = max(cap - (8 << 20), 16 << 20)   # headroom for Mosaic internals
    vmem_limit = int(min(max(demand + demand // 4 + (2 << 20), 32 << 20), ceiling))

    kernel = functools.partial(_mlp_kernel, exact_gelu=exact_gelu)

    out = pl.pallas_call(
        kernel,
        out_shape=jax.ShapeDtypeStruct((M_pad, Cout_p), out_dtype),
        grid_spec=pltpu.PrefetchScalarGridSpec(
            num_scalar_prefetch=0,
            grid=grid,
            in_specs=[
                pl.BlockSpec((tm, Cin_p), lambda i, k: (i, 0)),
                pl.BlockSpec((Cin_p, tch), lambda i, k: (0, k)),
                pl.BlockSpec((1, tch), lambda i, k: (0, k)),
                pl.BlockSpec((tch, Cout_p), lambda i, k: (k, 0)),
                pl.BlockSpec((1, Cout_p), lambda i, k: (0, 0)),
            ],
            out_specs=pl.BlockSpec((tm, Cout_p), lambda i, k: (i, 0)),
            scratch_shapes=[pltpu.VMEM((tm, Cout_p), jnp.float32)]),
        compiler_params=pltpu.CompilerParams(
            dimension_semantics=("parallel", "arbitrary"),
            vmem_limit_bytes=vmem_limit),
    )(x2, w1_t, b1_r, w2_t, b2_r)

    return out[:M, :Cout].reshape(orig_shape[:-1] + (Cout,))


# --------------------------------------------------------------------------
# Deterministic parameter init (PyTorch nn.Linear default: U(-1/sqrt(fan_in), +))
# --------------------------------------------------------------------------
def init_params(key, in_features, hidden_features=None, out_features=None):
    hidden_features = hidden_features or in_features
    out_features = out_features or in_features
    k1, k2, k3, k4 = jax.random.split(key, 4)
    bnd1 = 1.0 / math.sqrt(in_features)
    bnd2 = 1.0 / math.sqrt(hidden_features)
    return dict(
        fc1_w=jax.random.uniform(k1, (hidden_features, in_features), jnp.float32, -bnd1, bnd1),
        fc1_b=jax.random.uniform(k2, (hidden_features,), jnp.float32, -bnd1, bnd1),
        fc2_w=jax.random.uniform(k3, (out_features, hidden_features), jnp.float32, -bnd2, bnd2),
        fc2_b=jax.random.uniform(k4, (out_features,), jnp.float32, -bnd2, bnd2),
    )


# --------------------------------------------------------------------------
# Pure-JAX reference (exact erf GELU, f32) for a sanity check of the Pallas path
# --------------------------------------------------------------------------
def _ref_mlp(x, params):
    h = x @ params["fc1_w"].T + params["fc1_b"]
    h = jax.nn.gelu(h, approximate=False)
    y = h @ params["fc2_w"].T + params["fc2_b"]
    return y


if __name__ == "__main__":
    key = jax.random.PRNGKey(0)
    B, N, C = 2, 256, 32                 # (batch, tokens, channels), hidden = 4*C
    hidden = 4 * C
    kx, kp = jax.random.split(key)
    x = jax.random.normal(kx, (B, N, C), jnp.float32)
    params = init_params(kp, C, hidden, C)

    fwd = jax.jit(functools.partial(mlp_forward, tm=256))
    out = fwd(x, params)
    jax.block_until_ready(out)
    assert out.shape == (B, N, C) and out.dtype == jnp.float32

    ref = _ref_mlp(x, params)
    max_err = float(jnp.max(jnp.abs(out - ref)))
    assert max_err < 5e-2, max_err       # bf16-MXU + tanh-GELU tolerance
    print("KERNEL_OK")
</pallas_src>

<mosaic_0001>
module attributes {stable_mosaic.version = 11 : i64} {
  func.func @_mlp_kernel(%arg0: i32, %arg1: i32, %arg2: memref<256x128xbf16, #tpu.memory_space<vmem>>, %arg3: memref<128x128xbf16, #tpu.memory_space<vmem>>, %arg4: memref<1x128xf32, #tpu.memory_space<vmem>>, %arg5: memref<128x128xbf16, #tpu.memory_space<vmem>>, %arg6: memref<1x128xf32, #tpu.memory_space<vmem>>, %arg7: memref<256x128xf32, #tpu.memory_space<vmem>>, %arg8: memref<256x128xf32, #tpu.memory_space<vmem>>) attributes {dimension_semantics = [#tpu.dimension_semantics<parallel>, #tpu.dimension_semantics<arbitrary>], iteration_bounds = array<i64: 2, 1>, scalar_prefetch = 0 : i64, scratch_operands = 1 : i64, tpu.core_type = #tpu.core_type<tc>, window_params = [{transform_indices = @transform_0, window_bounds = array<i64: 256, 128>}, {transform_indices = @transform_1, window_bounds = array<i64: 128, 128>}, {transform_indices = @transform_2, window_bounds = array<i64: 1, 128>}, {transform_indices = @transform_3, window_bounds = array<i64: 128, 128>}, {pipeline_mode = #tpu.pipeline_mode<synchronous>, transform_indices = @transform_4, window_bounds = array<i64: 1, 128>}, {transform_indices = @transform_5, window_bounds = array<i64: 256, 128>}]} {
    %c0_i32 = arith.constant 0 : i32
    %0 = arith.cmpi eq, %arg1, %c0_i32 : i32
    %1 = arith.extui %0 : i1 to i32
    %c0_i32_0 = arith.constant 0 : i32
    %2 = arith.cmpi ne, %1, %c0_i32_0 : i32
    scf.if %2 {
      %cst_19 = arith.constant 0.000000e+00 : f32
      %31 = vector.broadcast %cst_19 : f32 to vector<256x128xf32>
      %c0_20 = arith.constant 0 : index
      %c0_21 = arith.constant 0 : index
      %32 = vector.load %arg8[%c0_20, %c0_21] : memref<256x128xf32, #tpu.memory_space<vmem>>, vector<256x128xf32>
      tpu.vector_store %arg8[%c0_20, %c0_21], %31 {strides = array<i32>} : memref<256x128xf32, #tpu.memory_space<vmem>>, vector<256x128xf32>,
    } else {
    }
    %c0 = arith.constant 0 : index
    %c0_1 = arith.constant 0 : index
    %3 = vector.load %arg2[%c0, %c0_1] : memref<256x128xbf16, #tpu.memory_space<vmem>>, vector<256x128xbf16>
    %c0_2 = arith.constant 0 : index
    %c0_3 = arith.constant 0 : index
    %4 = vector.load %arg3[%c0_2, %c0_3] : memref<128x128xbf16, #tpu.memory_space<vmem>>, vector<128x128xbf16>
    %cst = arith.constant dense<0.000000e+00> : vector<256x128xf32>
    %5 = tpu.matmul %3, %4, %cst {dimension_numbers = #tpu.dot_dimension_numbers<[1], [0], [0], [1], [0, 0, 1, 1], [], []>} : vector<256x128xbf16>, vector<128x128xbf16>, vector<256x128xf32> -> vector<256x128xf32>
    %c0_4 = arith.constant 0 : index
    %c0_5 = arith.constant 0 : index
    %6 = vector.load %arg4[%c0_4, %c0_5] : memref<1x128xf32, #tpu.memory_space<vmem>>, vector<1x128xf32>
    %7 = vector.broadcast %6 : vector<1x128xf32> to vector<256x128xf32>
    %8 = arith.addf %5, %7 : vector<256x128xf32>
    %cst_6 = arith.constant 5.000000e-01 : f32
    %9 = vector.broadcast %cst_6 : f32 to vector<256x128xf32>
    %10 = arith.mulf %9, %8 : vector<256x128xf32>
    %11 = arith.mulf %8, %8 : vector<256x128xf32>
    %12 = arith.mulf %11, %8 : vector<256x128xf32>
    %cst_7 = arith.constant 4.471500e-02 : f32
    %13 = vector.broadcast %cst_7 : f32 to vector<256x128xf32>
    %14 = arith.mulf %13, %12 : vector<256x128xf32>
    %15 = arith.addf %8, %14 : vector<256x128xf32>
    %cst_8 = arith.constant 0.797884583 : f32
    %16 = vector.broadcast %cst_8 : f32 to vector<256x128xf32>
    %17 = arith.mulf %16, %15 : vector<256x128xf32>
    %18 = math.tanh %17 : vector<256x128xf32>
    %cst_9 = arith.constant 1.000000e+00 : f32
    %19 = vector.broadcast %cst_9 : f32 to vector<256x128xf32>
    %20 = arith.addf %19, %18 : vector<256x128xf32>
    %21 = arith.mulf %10, %20 : vector<256x128xf32>
    %c0_10 = arith.constant 0 : index
    %c0_11 = arith.constant 0 : index
    %22 = vector.load %arg8[%c0_10, %c0_11] : memref<256x128xf32, #tpu.memory_space<vmem>>, vector<256x128xf32>
    %23 = arith.truncf %21 : vector<256x128xf32> to vector<256x128xbf16>
    %c0_12 = arith.constant 0 : index
    %c0_13 = arith.constant 0 : index
    %24 = vector.load %arg5[%c0_12, %c0_13] : memref<128x128xbf16, #tpu.memory_space<vmem>>, vector<128x128xbf16>
    %cst_14 = arith.constant dense<0.000000e+00> : vector<256x128xf32>
    %25 = tpu.matmul %23, %24, %cst_14 {dimension_numbers = #tpu.dot_dimension_numbers<[1], [0], [0], [1], [0, 0, 1, 1], [], []>} : vector<256x128xbf16>, vector<128x128xbf16>, vector<256x128xf32> -> vector<256x128xf32>
    %26 = arith.addf %22, %25 : vector<256x128xf32>
    %c0_15 = arith.constant 0 : index
    %c0_16 = arith.constant 0 : index
    %27 = vector.load %arg8[%c0_15, %c0_16] : memref<256x128xf32, #tpu.memory_space<vmem>>, vector<256x128xf32>
    tpu.vector_store %arg8[%c0_15, %c0_16], %26 {strides = array<i32>} : memref<256x128xf32, #tpu.memory_space<vmem>>, vector<256x128xf32>,
    %c0_i32_17 = arith.constant 0 : i32
    %28 = arith.cmpi eq, %arg1, %c0_i32_17 : i32
    %29 = arith.extui %28 : i1 to i32
    %c0_i32_18 = arith.constant 0 : i32
    %30 = arith.cmpi ne, %29, %c0_i32_18 : i32
    scf.if %30 {
      %c0_19 = arith.constant 0 : index
      %c0_20 = arith.constant 0 : index
      %31 = vector.load %arg8[%c0_19, %c0_20] : memref<256x128xf32, #tpu.memory_space<vmem>>, vector<256x128xf32>
      %c0_21 = arith.constant 0 : index
      %c0_22 = arith.constant 0 : index
      %32 = vector.load %arg6[%c0_21, %c0_22] : memref<1x128xf32, #tpu.memory_space<vmem>>, vector<1x128xf32>
      %33 = vector.broadcast %32 : vector<1x128xf32> to vector<256x128xf32>
      %34 = arith.addf %31, %33 : vector<256x128xf32>
      %c0_23 = arith.constant 0 : index
      %c0_24 = arith.constant 0 : index
      %35 = vector.load %arg7[%c0_23, %c0_24] : memref<256x128xf32, #tpu.memory_space<vmem>>, vector<256x128xf32>
      tpu.vector_store %arg7[%c0_23, %c0_24], %34 {strides = array<i32>} : memref<256x128xf32, #tpu.memory_space<vmem>>, vector<256x128xf32>,
    } else {
    }
    return
  }
  func.func @transform_0(%arg0: i32, %arg1: i32) -> (i32, i32) {
    %c0_i32 = arith.constant 0 : i32
    %c0_i32_0 = arith.constant 0 : i32
    return %arg0, %c0_i32 : i32, i32
  }
  func.func @transform_1(%arg0: i32, %arg1: i32) -> (i32, i32) {
    %c0_i32 = arith.constant 0 : i32
    %c0_i32_0 = arith.constant 0 : i32
    return %c0_i32, %arg1 : i32, i32
  }
  func.func @transform_2(%arg0: i32, %arg1: i32) -> (i32, i32) {
    %c0_i32 = arith.constant 0 : i32
    %c0_i32_0 = arith.constant 0 : i32
    return %c0_i32, %arg1 : i32, i32
  }
  func.func @transform_3(%arg0: i32, %arg1: i32) -> (i32, i32) {
    %c0_i32 = arith.constant 0 : i32
    %c0_i32_0 = arith.constant 0 : i32
    return %arg1, %c0_i32 : i32, i32
  }
  func.func @transform_4(%arg0: i32, %arg1: i32) -> (i32, i32) {
    %c0_i32 = arith.constant 0 : i32
    %c0_i32_0 = arith.constant 0 : i32
    %c0_i32_1 = arith.constant 0 : i32
    return %c0_i32, %c0_i32_0 : i32, i32
  }
  func.func @transform_5(%arg0: i32, %arg1: i32) -> (i32, i32) {
    %c0_i32 = arith.constant 0 : i32
    %c0_i32_0 = arith.constant 0 : i32
    return %arg0, %c0_i32 : i32, i32
  }
}

</mosaic_0001>

<llo_original>
// kernel: mlp_forward.1
$region0: #{mlp_forward.1}
  #allocation0 [shape = 'u32[]', space=smem, size = 0x4, offset = 0x4, fixed_abs, tag = 'smem constant byte address 0x4 - core index']
  #allocation1 [shape = 'u32[144,128]{1,0:T(1,128)}', space=vmem, size = 0x12000, scoped, tag = 'internal scratch']
  #allocation2 [shape = 'f32[256,128]{1,0:T(8,128)}', space=vmem, size = 0x20000, scoped, tag = 'scratch operand']
  %s0 = inlined_call_operand.vmem [shape: bf16[512,128], index: 0, kind: input, shape index: {}]
  %s1 = inlined_call_operand.vmem [shape: bf16[128,128], index: 1, kind: input, shape index: {}]
  %s2 = inlined_call_operand.vmem [shape: f32[1,128], index: 2, kind: input, shape index: {}]
  %s3 = inlined_call_operand.vmem [shape: bf16[128,128], index: 3, kind: input, shape index: {}]
  %s4 = inlined_call_operand.vmem [shape: f32[1,128], index: 4, kind: input, shape index: {}]
  %s5 = inlined_call_operand.vmem [shape: f32[512,128], index: 5, kind: output, shape index: {}]
  %s6 = sld [smem:[#allocation0]]
  $region61: #{mlp_forward.1} parent=0
    _
  %s8 = ssub.s32 1, %s6
  %s9 = scalar_select 0, %s8, %s6
  loop: start=0, step=1, limit=4
  $region2: #{mlp_forward.1} parent=0 // loop_pre_header
    _
  $region3: #{mlp_forward.1} parent=0 // loop_header
    %s11 = sphi 0, %s15
    %p12 = scmp.ge.s32.totalorder %s11, 4
    %s18 = sphi 0, %s30
    %s19 = sphi 0, %s26
    %s20 = sphi 0, %s18
    %s21 = sphi 0, %s19
    %s22 = sphi 0, %s20
    %s23 = sphi 0, %s21
    %s33 = sphi 0, %s35
    %s36 = sphi 0, %s33
    %s37 = sphi 0, %s36
    %s53 = sphi 0, %s37
    %s59 = sphi 0, %s61
    %s62 = sphi 0, %s59
    %s63 = sphi 0, %s62
    %s79 = sphi 0, %s63
    %s85 = sphi 0, %s87
    %s88 = sphi 0, %s85
    %s89 = sphi 0, %s88
    %s105 = sphi 0, %s89
    %s111 = sphi 0, %s113
    %s114 = sphi 0, %s111
    %s115 = sphi 0, %s114
    %s131 = sphi 0, %s115
    %s135 = sphi 0, %s135
    %s137 = sphi 0, %s135
    %s138 = sphi 0, %s137
    %s152 = sphi 0, %s138
    %s158 = sphi 0, %s160
    %s161 = sphi 0, %s158
    %s162 = sphi 0, %s161
    %s178 = sphi 0, %s162
  $region4: #{mlp_forward.1} parent=0 // loop_header_branch
    %14 = sbr.rel (%p12) target = $region8
  $region5: #{mlp_forward.1} parent=0 // loop_body
    %s16 = ssub.s32 %s11, 1
    %s17 = ssub.s32 %s11, 2
    %s24 = sadd.s32 1, %s19
    %p25 = scmp.ge.s32.totalorder %s24, 1
    %s26 = scalar_select %p25, 0, %s24
    %s27 = sadd.s32 1, %s18
    %s28 = scalar_select %p25, %s27, %s18
    %p29 = scmp.ge.s32.totalorder %s28, 2
    %s30 = scalar_select %p29, 0, %s28
    %s31 = ssub.s32 %s18, %s30
    %p32 = scmp.eq.s32.totalorder %s31, 0
    %s34 = sadd.s32 %s33, 1
    %s35 = scalar_select %p32, %s33, %s34
    %p38 = pneg %p32
    %p39 = scmp.eq.s32.totalorder %s11, 1
    %p40 = por %p38, %p39
    %p41 = scmp.ne.s32.totalorder %s33, %s36
    %p42 = scmp.eq.s32.totalorder %s11, 0
    %p43 = por %p41, %p42
    %p44 = scmp.ne.s32.totalorder %s33, %s36
    %p45 = scmp.eq.s32.totalorder %s16, 1
    %p46 = por %p44, %p45
    %p47 = scmp.ne.s32.totalorder %s36, %s37
    %p48 = scmp.eq.s32.totalorder %s16, 0
    %p49 = por %p47, %p48
    %p50 = scmp.ne.s32.totalorder %s36, %s37
    %p51 = scmp.eq.s32.totalorder %s17, 1
    %p52 = por %p50, %p51
    %p54 = scmp.ne.s32.totalorder %s37, %s53
    %p55 = scmp.eq.s32.totalorder %s17, 0
    %p56 = por %p54, %p55
    %s57 = ssub.s32 %s19, %s26
    %p58 = scmp.eq.s32.totalorder %s57, 0
    %s60 = sadd.s32 %s59, 1
    %s61 = scalar_select %p58, %s59, %s60
    %p64 = pneg %p58
    %p65 = scmp.eq.s32.totalorder %s11, 1
    %p66 = por %p64, %p65
    %p67 = scmp.ne.s32.totalorder %s59, %s62
    %p68 = scmp.eq.s32.totalorder %s11, 0
    %p69 = por %p67, %p68
    %p70 = scmp.ne.s32.totalorder %s59, %s62
    %p71 = scmp.eq.s32.totalorder %s16, 1
    %p72 = por %p70, %p71
    %p73 = scmp.ne.s32.totalorder %s62, %s63
    %p74 = scmp.eq.s32.totalorder %s16, 0
    %p75 = por %p73, %p74
    %p76 = scmp.ne.s32.totalorder %s62, %s63
    %p77 = scmp.eq.s32.totalorder %s17, 1
    %p78 = por %p76, %p77
    %p80 = scmp.ne.s32.totalorder %s63, %s79
    %p81 = scmp.eq.s32.totalorder %s17, 0
    %p82 = por %p80, %p81
    %s83 = ssub.s32 %s19, %s26
    %p84 = scmp.eq.s32.totalorder %s83, 0
    %s86 = sadd.s32 %s85, 1
    %s87 = scalar_select %p84, %s85, %s86
    %p90 = pneg %p84
    %p91 = scmp.eq.s32.totalorder %s11, 1
    %p92 = por %p90, %p91
    %p93 = scmp.ne.s32.totalorder %s85, %s88
    %p94 = scmp.eq.s32.totalorder %s11, 0
    %p95 = por %p93, %p94
    %p96 = scmp.ne.s32.totalorder %s85, %s88
    %p97 = scmp.eq.s32.totalorder %s16, 1
    %p98 = por %p96, %p97
    %p99 = scmp.ne.s32.totalorder %s88, %s89
    %p100 = scmp.eq.s32.totalorder %s16, 0
    %p101 = por %p99, %p100
    %p102 = scmp.ne.s32.totalorder %s88, %s89
    %p103 = scmp.eq.s32.totalorder %s17, 1
    %p104 = por %p102, %p103
    %p106 = scmp.ne.s32.totalorder %s89, %s105
    %p107 = scmp.eq.s32.totalorder %s17, 0
    %p108 = por %p106, %p107
    %s109 = ssub.s32 %s19, %s26
    %p110 = scmp.eq.s32.totalorder %s109, 0
    %s112 = sadd.s32 %s111, 1
    %s113 = scalar_select %p110, %s111, %s112
    %p116 = pneg %p110
    %p117 = scmp.eq.s32.totalorder %s11, 1
    %p118 = por %p116, %p117
    %p119 = scmp.ne.s32.totalorder %s111, %s114
    %p120 = scmp.eq.s32.totalorder %s11, 0
    %p121 = por %p119, %p120
    %p122 = scmp.ne.s32.totalorder %s111, %s114
    %p123 = scmp.eq.s32.totalorder %s16, 1
    %p124 = por %p122, %p123
    %p125 = scmp.ne.s32.totalorder %s114, %s115
    %p126 = scmp.eq.s32.totalorder %s16, 0
    %p127 = por %p125, %p126
    %p128 = scmp.ne.s32.totalorder %s114, %s115
    %p129 = scmp.eq.s32.totalorder %s17, 1
    %p130 = por %p128, %p129
    %p132 = scmp.ne.s32.totalorder %s115, %s131
    %p133 = scmp.eq.s32.totalorder %s17, 0
    %p134 = por %p132, %p133
    %s136 = sadd.s32 %s135, 1
    %p139 = scmp.eq.s32.totalorder %s11, 1
    %p140 = scmp.ne.s32.totalorder %s135, %s137
    %p141 = scmp.eq.s32.totalorder %s11, 0
    %p142 = por %p140, %p141
    %p143 = scmp.ne.s32.totalorder %s135, %s137
    %p144 = scmp.eq.s32.totalorder %s16, 1
    %p145 = por %p143, %p144
    %p146 = scmp.ne.s32.totalorder %s137, %s138
    %p147 = scmp.eq.s32.totalorder %s16, 0
    %p148 = por %p146, %p147
    %p149 = scmp.ne.s32.totalorder %s137, %s138
    %p150 = scmp.eq.s32.totalorder %s17, 1
    %p151 = por %p149, %p150
    %p153 = scmp.ne.s32.totalorder %s138, %s152
    %p154 = scmp.eq.s32.totalorder %s17, 0
    %p155 = por %p153, %p154
    %s156 = ssub.s32 %s18, %s30
    %p157 = scmp.eq.s32.totalorder %s156, 0
    %s159 = sadd.s32 %s158, 1
    %s160 = scalar_select %p157, %s158, %s159
    %p163 = pneg %p157
    %p164 = scmp.eq.s32.totalorder %s11, 1
    %p165 = por %p163, %p164
    %p166 = scmp.ne.s32.totalorder %s158, %s161
    %p167 = scmp.eq.s32.totalorder %s11, 0
    %p168 = por %p166, %p167
    %p169 = scmp.ne.s32.totalorder %s158, %s161
    %p170 = scmp.eq.s32.totalorder %s16, 1
    %p171 = por %p169, %p170
    %p172 = scmp.ne.s32.totalorder %s161, %s162
    %p173 = scmp.eq.s32.totalorder %s16, 0
    %p174 = por %p172, %p173
    %p175 = scmp.ne.s32.totalorder %s161, %s162
    %p176 = scmp.eq.s32.totalorder %s17, 1
    %p177 = por %p175, %p176
    %p179 = scmp.ne.s32.totalorder %s162, %s178
    %p180 = scmp.eq.s32.totalorder %s17, 0
    %p181 = por %p179, %p180
    %p182 = scmp.le.s32.totalorder 1, %s11
    %p183 = scmp.lt.s32.totalorder %s11, 3
    %p184 = pnand %p182, %p183
    %p185 = pneg %p184
    // Predicated region
    $region9: #{mlp_forward.1} parent=5 // pred_check
      _
    $region10: #{mlp_forward.1} parent=5 // pred_check_branch
      %187 = sbr.rel (%p184) target = $region12
    $region11: #{mlp_forward.1} parent=5 // pred_region
      %s188 = ssub.s32 %s11, 1
      // Predicated region
      $region13: #{mlp_forward.1} parent=11 // pred_check
        %p189 = pneg %p75
      $region14: #{mlp_forward.1} parent=11 // pred_check_branch
        %191 = sbr.rel (%p189) target = $region16
      $region15: #{mlp_forward.1} parent=11 // pred_region
        %p192 = scmp.lt.s32.totalorder %s21, 0
        %s193 = scalar_select %p192, %s21, 0
        %s194 = smul.addr %s193, 4
        %s195 = scalar_lea.vmem %s1, %s194
      $region16: #{mlp_forward.1} parent=11 // pred_fallthru
        _
      // Predicated region
      $region17: #{mlp_forward.1} parent=11 // pred_check
        %p196 = pneg %p101
      $region18: #{mlp_forward.1} parent=11 // pred_check_branch
        %198 = sbr.rel (%p196) target = $region20
      $region19: #{mlp_forward.1} parent=11 // pred_region
        %p199 = scmp.lt.s32.totalorder %s21, 0
        %s200 = scalar_select %p199, %s21, 0
        %s201 = scalar_lea.vmem %s2, %s200
      $region20: #{mlp_forward.1} parent=11 // pred_fallthru
        _
      // Predicated region
      $region21: #{mlp_forward.1} parent=11 // pred_check
        %p202 = pneg %p127
      $region22: #{mlp_forward.1} parent=11 // pred_check_branch
        %204 = sbr.rel (%p202) target = $region24
      $region23: #{mlp_forward.1} parent=11 // pred_region
        %s205 = smul.u32 16, %s21
        %p206 = scmp.lt.s32.totalorder %s205, 15
        %s207 = scalar_select %p206, %s205, 15
        %s208 = smul.addr %s207, 4
        %s209 = scalar_lea.vmem %s3, %s208
        %s210 = smul.u32 16, %s21
      $region24: #{mlp_forward.1} parent=11 // pred_fallthru
        _
      // Predicated region
      $region25: #{mlp_forward.1} parent=11 // pred_check
        %p211 = pneg %p148
      $region26: #{mlp_forward.1} parent=11 // pred_check_branch
        %213 = sbr.rel (%p211) target = $region28
      $region27: #{mlp_forward.1} parent=11 // pred_region
        _
      $region28: #{mlp_forward.1} parent=11 // pred_fallthru
        _
    $region12: #{mlp_forward.1} parent=5 // pred_fallthru
      _
    %p214 = scmp.lt.s32.totalorder %s11, 2
    // Predicated region
    $region29: #{mlp_forward.1} parent=5 // pred_check
      %p215 = pneg %p214
    $region30: #{mlp_forward.1} parent=5 // pred_check_branch
      %217 = sbr.rel (%p215) target = $region32
    $region31: #{mlp_forward.1} parent=5 // pred_region
      // Predicated region
      $region33: #{mlp_forward.1} parent=31 // pred_check
        %p218 = pneg %p43
      $region34: #{mlp_forward.1} parent=31 // pred_check_branch
        %220 = sbr.rel (%p218) target = $region36
      $region35: #{mlp_forward.1} parent=31 // pred_region
        %s221 = smul.u32 32, %s18
        %p222 = scmp.lt.s32.totalorder %s221, 63
        %s223 = scalar_select %p222, %s221, 63
        %s224 = smul.addr %s223, 4
        %s225 = scalar_lea.vmem %s0, %s224
        %s226 = smul.u32 32, %s18
      $region36: #{mlp_forward.1} parent=31 // pred_fallthru
        _
    $region32: #{mlp_forward.1} parent=5 // pred_fallthru
      _
    %p227 = scmp.le.s32.totalorder 1, %s11
    %p228 = scmp.lt.s32.totalorder %s11, 3
    %p229 = pnand %p227, %p228
    %p230 = pneg %p229
    // Predicated region
    $region37: #{mlp_forward.1} parent=5 // pred_check
      _
    $region38: #{mlp_forward.1} parent=5 // pred_check_branch
      %232 = sbr.rel (%p229) target = $region40
    $region39: #{mlp_forward.1} parent=5 // pred_region
      %s233 = ssub.s32 %s11, 1
      %s234 = smul.u32 32, %s20
      %p235 = scmp.lt.s32.totalorder %s234, 63
      %s236 = scalar_select %p235, %s234, 63
      %s237 = smul.addr %s236, 4
      %s238 = scalar_lea.vmem %s0, %s237
      %p239 = pneg %p49
      %p240 = pneg %p46
      %p241 = scmp.lt.s32.totalorder %s21, 0
      %s242 = scalar_select %p241, %s21, 0
      %s243 = smul.addr %s242, 4
      %s244 = scalar_lea.vmem %s1, %s243
      %p245 = pneg %p75
      %p246 = pneg %p72
      %p247 = scmp.lt.s32.totalorder %s21, 0
      %s248 = scalar_select %p247, %s21, 0
      %s249 = scalar_lea.vmem %s2, %s248
      %p250 = pneg %p101
      %p251 = pneg %p98
      %s252 = smul.u32 16, %s21
      %p253 = scmp.lt.s32.totalorder %s252, 15
      %s254 = scalar_select %p253, %s252, 15
      %s255 = smul.addr %s254, 4
      %s256 = scalar_lea.vmem %s3, %s255
      %p257 = pneg %p127
      %p258 = pneg %p124
      %p259 = pneg %p148
      %p260 = pneg %p145
      %p261 = pneg %p174
      %p262 = pneg %p171
      %s263 = smul.u32 32, %s20
      %p264 = scmp.lt.s32.totalorder %s263, 63
      %s265 = scalar_select %p264, %s263, 63
      %s266 = smul.addr %s265, 8
      %s267 = scalar_lea.vmem %s5, %s266
      %s268 = smul.u32 32, %s20
      %p269 = scmp.lt.s32.totalorder %s268, 63
      %s270 = scalar_select %p269, %s268, 63
      %s271 = smul.addr %s270, 4
      %s272 = scalar_lea.vmem %s0, %s271
      %s273 = smul.u32 32, %s20
      %p274 = scmp.lt.s32.totalorder %s21, 0
      %s275 = scalar_select %p274, %s21, 0
      %s276 = smul.addr %s275, 4
      %s277 = scalar_lea.vmem %s1, %s276
      %p278 = scmp.lt.s32.totalorder %s21, 0
      %s279 = scalar_select %p278, %s21, 0
      %s280 = scalar_lea.vmem %s2, %s279
      %s281 = smul.u32 16, %s21
      %p282 = scmp.lt.s32.totalorder %s281, 15
      %s283 = scalar_select %p282, %s281, 15
      %s284 = smul.addr %s283, 4
      %s285 = scalar_lea.vmem %s3, %s284
      %s286 = smul.u32 16, %s21
      %s287 = smul.u32 32, %s20
      %p288 = scmp.lt.s32.totalorder %s287, 63
      %s289 = scalar_select %p288, %s287, 63
      %s290 = smul.addr %s289, 8
      %s291 = scalar_lea.vmem %s5, %s290
      %s292 = smul.u32 32, %s20
      %p294 = scmp.eq.s32.totalorder %s21, 0
      // Predicated region
      $region41: #{mlp_forward.1} parent=39 // pred_check
        %p295 = pneg %p294
      $region42: #{mlp_forward.1} parent=39 // pred_check_branch
        %297 = sbr.rel (%p295) target = $region44
      $region43: #{mlp_forward.1} parent=39 // pred_region
        %298 = vst [vmem:[#allocation2] sm:$0xff] 0.0
        %299 = vst [vmem:[#allocation2 + $0x8] sm:$0xff] 0.0
        %300 = vst [vmem:[#allocation2 + $0x10] sm:$0xff] 0.0
        %301 = vst [vmem:[#allocation2 + $0x18] sm:$0xff] 0.0
        %302 = vst [vmem:[#allocation2 + $0x20] sm:$0xff] 0.0
        %303 = vst [vmem:[#allocation2 + $0x28] sm:$0xff] 0.0
        %304 = vst [vmem:[#allocation2 + $0x30] sm:$0xff] 0.0
        %305 = vst [vmem:[#allocation2 + $0x38] sm:$0xff] 0.0
        %306 = vst [vmem:[#allocation2 + $0x40] sm:$0xff] 0.0
        %307 = vst [vmem:[#allocation2 + $0x48] sm:$0xff] 0.0
        %308 = vst [vmem:[#allocation2 + $0x50] sm:$0xff] 0.0
        %309 = vst [vmem:[#allocation2 + $0x58] sm:$0xff] 0.0
        %310 = vst [vmem:[#allocation2 + $0x60] sm:$0xff] 0.0
        %311 = vst [vmem:[#allocation2 + $0x68] sm:$0xff] 0.0
        %312 = vst [vmem:[#allocation2 + $0x70] sm:$0xff] 0.0
        %313 = vst [vmem:[#allocation2 + $0x78] sm:$0xff] 0.0
        %314 = vst [vmem:[#allocation2 + $0x80] sm:$0xff] 0.0
        %315 = vst [vmem:[#allocation2 + $0x88] sm:$0xff] 0.0
        %316 = vst [vmem:[#allocation2 + $0x90] sm:$0xff] 0.0
        %317 = vst [vmem:[#allocation2 + $0x98] sm:$0xff] 0.0
        %318 = vst [vmem:[#allocation2 + $0xa0] sm:$0xff] 0.0
        %319 = vst [vmem:[#allocation2 + $0xa8] sm:$0xff] 0.0
        %320 = vst [vmem:[#allocation2 + $0xb0] sm:$0xff] 0.0
        %321 = vst [vmem:[#allocation2 + $0xb8] sm:$0xff] 0.0
        %322 = vst [vmem:[#allocation2 + $0xc0] sm:$0xff] 0.0
        %323 = vst [vmem:[#allocation2 + $0xc8] sm:$0xff] 0.0
        %324 = vst [vmem:[#allocation2 + $0xd0] sm:$0xff] 0.0
        %325 = vst [vmem:[#allocation2 + $0xd8] sm:$0xff] 0.0
        %326 = vst [vmem:[#allocation2 + $0xe0] sm:$0xff] 0.0
        %327 = vst [vmem:[#allocation2 + $0xe8] sm:$0xff] 0.0
        %328 = vst [vmem:[#allocation2 + $0xf0] sm:$0xff] 0.0
        %329 = vst [vmem:[#allocation2 + $0xf8] sm:$0xff] 0.0
      $region44: #{mlp_forward.1} parent=39 // pred_fallthru
        _
      %v330 = vld [vmem:[%s272] sm:$0xf]
      %v331 = vld [vmem:[%s272 + $0x4] sm:$0xf]
      %v332 = vld [vmem:[%s272 + $0x8] sm:$0xf]
      %v333 = vld [vmem:[%s272 + $0xc] sm:$0xf]
      %v334 = vld [vmem:[%s272 + $0x10] sm:$0xf]
      %v335 = vld [vmem:[%s272 + $0x14] sm:$0xf]
      %v336 = vld [vmem:[%s272 + $0x18] sm:$0xf]
      %v337 = vld [vmem:[%s272 + $0x1c] sm:$0xf]
      %v338 = vld [vmem:[%s272 + $0x20] sm:$0xf]
      %v339 = vld [vmem:[%s272 + $0x24] sm:$0xf]
      %v340 = vld [vmem:[%s272 + $0x28] sm:$0xf]
      %v341 = vld [vmem:[%s272 + $0x2c] sm:$0xf]
      %v342 = vld [vmem:[%s272 + $0x30] sm:$0xf]
      %v343 = vld [vmem:[%s272 + $0x34] sm:$0xf]
      %v344 = vld [vmem:[%s272 + $0x38] sm:$0xf]
      %v345 = vld [vmem:[%s272 + $0x3c] sm:$0xf]
      %v346 = vld [vmem:[%s272 + $0x40] sm:$0xf]
      %v347 = vld [vmem:[%s272 + $0x44] sm:$0xf]
      %v348 = vld [vmem:[%s272 + $0x48] sm:$0xf]
      %v349 = vld [vmem:[%s272 + $0x4c] sm:$0xf]
      %v350 = vld [vmem:[%s272 + $0x50] sm:$0xf]
      %v351 = vld [vmem:[%s272 + $0x54] sm:$0xf]
      %v352 = vld [vmem:[%s272 + $0x58] sm:$0xf]
      %v353 = vld [vmem:[%s272 + $0x5c] sm:$0xf]
      %v354 = vld [vmem:[%s272 + $0x60] sm:$0xf]
      %v355 = vld [vmem:[%s272 + $0x64] sm:$0xf]
      %v356 = vld [vmem:[%s272 + $0x68] sm:$0xf]
      %v357 = vld [vmem:[%s272 + $0x6c] sm:$0xf]
      %v358 = vld [vmem:[%s272 + $0x70] sm:$0xf]
      %v359 = vld [vmem:[%s272 + $0x74] sm:$0xf]
      %v360 = vld [vmem:[%s272 + $0x78] sm:$0xf]
      %v361 = vld [vmem:[%s272 + $0x7c] sm:$0xf]
      %v362 = vld [vmem:[%s277] sm:$0xf]
      %v363 = vld [vmem:[%s277 + $0x4] sm:$0xf]
      %v364 = vld [vmem:[%s277 + $0x8] sm:$0xf]
      %v365 = vld [vmem:[%s277 + $0xc] sm:$0xf]
      %v366 = vld [vmem:[%s277 + $0x10] sm:$0xf]
      %v367 = vld [vmem:[%s277 + $0x14] sm:$0xf]
      %v368 = vld [vmem:[%s277 + $0x18] sm:$0xf]
      %v369 = vld [vmem:[%s277 + $0x1c] sm:$0xf]
      %v370 = vld [vmem:[%s277 + $0x20] sm:$0xf]
      %v371 = vld [vmem:[%s277 + $0x24] sm:$0xf]
      %v372 = vld [vmem:[%s277 + $0x28] sm:$0xf]
      %v373 = vld [vmem:[%s277 + $0x2c] sm:$0xf]
      %v374 = vld [vmem:[%s277 + $0x30] sm:$0xf]
      %v375 = vld [vmem:[%s277 + $0x34] sm:$0xf]
      %v376 = vld [vmem:[%s277 + $0x38] sm:$0xf]
      %v377 = vld [vmem:[%s277 + $0x3c] sm:$0xf]
      %v378 = vld [vmem:[%s280] sm:$0x1]
      %v380 = vlaneseq
      %v381 = vshrl.u32 %v380, 7
      %v382 = vsub.s32 0, %v381
      %v383 = vrot.slane %v378, %v382
      %v417 = vunpack.c.l.b16 %v330
      %v418 = vunpack.c.l.b16 %v331
      %v419 = vunpack.c.l.b16 %v332
      %v420 = vunpack.c.l.b16 %v333
      %v421 = vunpack.c.l.b16 %v334
      %v422 = vunpack.c.l.b16 %v335
      %v423 = vunpack.c.l.b16 %v336
      %v424 = vunpack.c.l.b16 %v337
      %v425 = vunpack.c.l.b16 %v338
      %v426 = vunpack.c.l.b16 %v339
      %v427 = vunpack.c.l.b16 %v340
      %v428 = vunpack.c.l.b16 %v341
      %v429 = vunpack.c.l.b16 %v342
      %v430 = vunpack.c.l.b16 %v343
      %v431 = vunpack.c.l.b16 %v344
      %v432 = vunpack.c.l.b16 %v345
      %v433 = vunpack.c.l.b16 %v346
      %v434 = vunpack.c.l.b16 %v347
      %v435 = vunpack.c.l.b16 %v348
      %v436 = vunpack.c.l.b16 %v349
      %v437 = vunpack.c.l.b16 %v350
      %v438 = vunpack.c.l.b16 %v351
      %v439 = vunpack.c.l.b16 %v352
      %v440 = vunpack.c.l.b16 %v353
      %v441 = vunpack.c.l.b16 %v354
      %v442 = vunpack.c.l.b16 %v355
      %v443 = vunpack.c.l.b16 %v356
      %v444 = vunpack.c.l.b16 %v357
      %v445 = vunpack.c.l.b16 %v358
      %v446 = vunpack.c.l.b16 %v359
      %v447 = vunpack.c.l.b16 %v360
      %v448 = vunpack.c.l.b16 %v361
      %v449 = vpack.c.b16 %v418, %v417
      %v450 = vpack.c.b16 %v420, %v419
      %v451 = vpack.c.b16 %v422, %v421
      %v452 = vpack.c.b16 %v424, %v423
      %v453 = vpack.c.b16 %v426, %v425
      %v454 = vpack.c.b16 %v428, %v427
      %v455 = vpack.c.b16 %v430, %v429
      %v456 = vpack.c.b16 %v432, %v431
      %v457 = vpack.c.b16 %v434, %v433
      %v458 = vpack.c.b16 %v436, %v435
      %v459 = vpack.c.b16 %v438, %v437
      %v460 = vpack.c.b16 %v440, %v439
      %v461 = vpack.c.b16 %v442, %v441
      %v462 = vpack.c.b16 %v444, %v443
      %v463 = vpack.c.b16 %v446, %v445
      %v464 = vpack.c.b16 %v448, %v447
      %v497 = vunpack.c.l.b16 %v362
      %v498 = vunpack.c.l.b16 %v363
      %v499 = vunpack.c.l.b16 %v364
      %v500 = vunpack.c.l.b16 %v365
      %v501 = vunpack.c.l.b16 %v366
      %v502 = vunpack.c.l.b16 %v367
      %v503 = vunpack.c.l.b16 %v368
      %v504 = vunpack.c.l.b16 %v369
      %v505 = vunpack.c.l.b16 %v370
      %v506 = vunpack.c.l.b16 %v371
      %v507 = vunpack.c.l.b16 %v372
      %v508 = vunpack.c.l.b16 %v373
      %v509 = vunpack.c.l.b16 %v374
      %v510 = vunpack.c.l.b16 %v375
      %v511 = vunpack.c.l.b16 %v376
      %v512 = vunpack.c.l.b16 %v377
      %v513 = vpack.c.b16 %v498, %v497
      %v514 = vpack.c.b16 %v500, %v499
      %v515 = vpack.c.b16 %v502, %v501
      %v516 = vpack.c.b16 %v504, %v503
      %v517 = vpack.c.b16 %v506, %v505
      %v518 = vpack.c.b16 %v508, %v507
      %v519 = vpack.c.b16 %v510, %v509
      %v520 = vpack.c.b16 %v512, %v511
      %529 = vmatprep.subr.bf16.mxu0 0
      %530 = vmatpush1.bf16.msra.mxu0 %v520
      %531 = vmatprep.subr.bf16.mxu0 0
      %532 = vmatpush1.bf16.msra.mxu0 %v519
      %533 = vmatprep.subr.bf16.mxu0 0
      %534 = vmatpush1.bf16.msra.mxu0 %v518
      %535 = vmatprep.subr.bf16.mxu0 0
      %536 = vmatpush1.bf16.msra.mxu0 %v517
      %537 = vmatprep.subr.bf16.mxu0 0
      %538 = vmatpush1.bf16.msra.mxu0 %v516
      %539 = vmatprep.subr.bf16.mxu0 0
      %540 = vmatpush1.bf16.msra.mxu0 %v515
      %541 = vmatprep.subr.bf16.mxu0 0
      %542 = vmatpush1.bf16.msra.mxu0 %v514
      %543 = vmatprep.subr.bf16.mxu0 0
      %544 = vmatpush1.bf16.msra.mxu0 %v513
      %545 = vmatprep.subr.bf16.mxu0 0
      %546 = vmatpush2.bf16.msra.mxu0 0
      %547 = vmatprep.subr.bf16.mxu0 0
      %548 = vmatpush2.bf16.msra.mxu0 0
      %549 = vmatprep.subr.bf16.mxu0 0
      %550 = vmatpush2.bf16.msra.mxu0 0
      %551 = vmatprep.subr.bf16.mxu0 0
      %552 = vmatpush2.bf16.msra.mxu0 0
      %553 = vmatprep.subr.bf16.mxu0 0
      %554 = vmatpush2.bf16.msra.mxu0 0
      %555 = vmatprep.subr.bf16.mxu0 0
      %556 = vmatpush2.bf16.msra.mxu0 0
      %557 = vmatprep.subr.bf16.mxu0 0
      %558 = vmatpush2.bf16.msra.mxu0 0
      %559 = vmatprep.subr.bf16.mxu0 0
      %560 = vmatpush2.bf16.msra.mxu0 0
      %561 = vmatprep.mubr.bf16.mxu0 0
      %562 = vmatmul.mubr.bf16.gmra.mxu0 %v449
      %v563 = vpop.f32.mrf.mxu0
      %v564 = vadd.f32 %v383, %v563
      %v565 = vpop.f32.mrf.mxu0
      %v566 = vpop.f32.mrf.mxu0
      %v567 = vadd.f32 %v383, %v566
      %v568 = vpop.f32.mrf.mxu0
      %569 = vmatprep.mubr.bf16.mxu0 0
      %570 = vmatmul.mubr.bf16.gmra.mxu0 %v450
      %v571 = vpop.f32.mrf.mxu0
      %v572 = vadd.f32 %v383, %v571
      %v573 = vpop.f32.mrf.mxu0
      %v574 = vpop.f32.mrf.mxu0
      %v575 = vadd.f32 %v383, %v574
      %v576 = vpop.f32.mrf.mxu0
      %577 = vmatprep.mubr.bf16.mxu0 0
      %578 = vmatmul.mubr.bf16.gmra.mxu0 %v451
      %v579 = vpop.f32.mrf.mxu0
      %v580 = vadd.f32 %v383, %v579
      %v581 = vpop.f32.mrf.mxu0
      %v582 = vpop.f32.mrf.mxu0
      %v583 = vadd.f32 %v383, %v582
      %v584 = vpop.f32.mrf.mxu0
      %585 = vmatprep.mubr.bf16.mxu0 0
      %586 = vmatmul.mubr.bf16.gmra.mxu0 %v452
      %v587 = vpop.f32.mrf.mxu0
      %v588 = vadd.f32 %v383, %v587
      %v589 = vpop.f32.mrf.mxu0
      %v590 = vpop.f32.mrf.mxu0
      %v591 = vadd.f32 %v383, %v590
      %v592 = vpop.f32.mrf.mxu0
      %593 = vmatprep.mubr.bf16.mxu0 0
      %594 = vmatmul.mubr.bf16.gmra.mxu0 %v453
      %v595 = vpop.f32.mrf.mxu0
      %v596 = vadd.f32 %v383, %v595
      %v597 = vpop.f32.mrf.mxu0
      %v598 = vpop.f32.mrf.mxu0
      %v599 = vadd.f32 %v383, %v598
      %v600 = vpop.f32.mrf.mxu0
      %601 = vmatprep.mubr.bf16.mxu0 0
      %602 = vmatmul.mubr.bf16.gmra.mxu0 %v454
      %v603 = vpop.f32.mrf.mxu0
      %v604 = vadd.f32 %v383, %v603
      %v605 = vpop.f32.mrf.mxu0
      %v606 = vpop.f32.mrf.mxu0
      %v607 = vadd.f32 %v383, %v606
      %v608 = vpop.f32.mrf.mxu0
      %609 = vmatprep.mubr.bf16.mxu0 0
      %610 = vmatmul.mubr.bf16.gmra.mxu0 %v455
      %v611 = vpop.f32.mrf.mxu0
      %v612 = vadd.f32 %v383, %v611
      %v613 = vpop.f32.mrf.mxu0
      %v614 = vpop.f32.mrf.mxu0
      %v615 = vadd.f32 %v383, %v614
      %v616 = vpop.f32.mrf.mxu0
      %617 = vmatprep.mubr.bf16.mxu0 0
      %618 = vmatmul.mubr.bf16.gmra.mxu0 %v456
      %v619 = vpop.f32.mrf.mxu0
      %v620 = vadd.f32 %v383, %v619
      %v621 = vpop.f32.mrf.mxu0
      %v622 = vpop.f32.mrf.mxu0
      %v623 = vadd.f32 %v383, %v622
      %v624 = vpop.f32.mrf.mxu0
      %625 = vmatprep.mubr.bf16.mxu0 0
      %626 = vmatmul.mubr.bf16.gmra.mxu0 %v457
      %v627 = vpop.f32.mrf.mxu0
      %v628 = vadd.f32 %v383, %v627
      %v629 = vpop.f32.mrf.mxu0
      %v630 = vpop.f32.mrf.mxu0
      %v631 = vadd.f32 %v383, %v630
      %v632 = vpop.f32.mrf.mxu0
      %633 = vmatprep.mubr.bf16.mxu0 0
      %634 = vmatmul.mubr.bf16.gmra.mxu0 %v458
      %v635 = vpop.f32.mrf.mxu0
      %v636 = vadd.f32 %v383, %v635
      %v637 = vpop.f32.mrf.mxu0
      %v638 = vpop.f32.mrf.mxu0
      %v639 = vadd.f32 %v383, %v638
      %v640 = vpop.f32.mrf.mxu0
      %641 = vmatprep.mubr.bf16.mxu0 0
      %642 = vmatmul.mubr.bf16.gmra.mxu0 %v459
      %v643 = vpop.f32.mrf.mxu0
      %v644 = vadd.f32 %v383, %v643
      %v645 = vpop.f32.mrf.mxu0
      %v646 = vpop.f32.mrf.mxu0
      %v647 = vadd.f32 %v383, %v646
      %v648 = vpop.f32.mrf.mxu0
      %649 = vmatprep.mubr.bf16.mxu0 0
      %650 = vmatmul.mubr.bf16.gmra.mxu0 %v460
      %v651 = vpop.f32.mrf.mxu0
      %v652 = vadd.f32 %v383, %v651
      %v653 = vpop.f32.mrf.mxu0
      %v654 = vpop.f32.mrf.mxu0
      %v655 = vadd.f32 %v383, %v654
      %v656 = vpop.f32.mrf.mxu0
      %657 = vmatprep.mubr.bf16.mxu0 0
      %658 = vmatmul.mubr.bf16.gmra.mxu0 %v461
      %v659 = vpop.f32.mrf.mxu0
      %v660 = vadd.f32 %v383, %v659
      %v661 = vpop.f32.mrf.mxu0
      %v662 = vpop.f32.mrf.mxu0
      %v663 = vadd.f32 %v383, %v662
      %v664 = vpop.f32.mrf.mxu0
      %665 = vmatprep.mubr.bf16.mxu0 0
      %666 = vmatmul.mubr.bf16.gmra.mxu0 %v462
      %v667 = vpop.f32.mrf.mxu0
      %v668 = vadd.f32 %v383, %v667
      %v669 = vpop.f32.mrf.mxu0
      %v670 = vpop.f32.mrf.mxu0
      %v671 = vadd.f32 %v383, %v670
      %v672 = vpop.f32.mrf.mxu0
      %673 = vmatprep.mubr.bf16.mxu0 0
      %674 = vmatmul.mubr.bf16.gmra.mxu0 %v463
      %v675 = vpop.f32.mrf.mxu0
      %v676 = vadd.f32 %v383, %v675
      %v677 = vpop.f32.mrf.mxu0
      %v678 = vpop.f32.mrf.mxu0
      %v679 = vadd.f32 %v383, %v678
      %v680 = vpop.f32.mrf.mxu0
      %681 = vmatprep.mubr.bf16.mxu0 0
      %682 = vmatmul.mubr.bf16.gmra.mxu0 %v464
      %v683 = vpop.f32.mrf.mxu0
      %v684 = vadd.f32 %v383, %v683
      %v685 = vpop.f32.mrf.mxu0
      %v686 = vpop.f32.mrf.mxu0
      %v687 = vadd.f32 %v383, %v686
      %v688 = vpop.f32.mrf.mxu0
      %689 = vdwg.mxu0
      %v690 = vmul.f32 %v564, 0.5
      %v691 = vmul.f32 %v567, 0.5
      %v692 = vmul.f32 %v572, 0.5
      %v693 = vmul.f32 %v575, 0.5
      %v694 = vmul.f32 %v580, 0.5
      %v695 = vmul.f32 %v583, 0.5
      %v696 = vmul.f32 %v588, 0.5
      %v697 = vmul.f32 %v591, 0.5
      %v698 = vmul.f32 %v596, 0.5
      %v699 = vmul.f32 %v599, 0.5
      %v700 = vmul.f32 %v604, 0.5
      %v701 = vmul.f32 %v607, 0.5
      %v702 = vmul.f32 %v612, 0.5
      %v703 = vmul.f32 %v615, 0.5
      %v704 = vmul.f32 %v620, 0.5
      %v705 = vmul.f32 %v623, 0.5
      %v706 = vmul.f32 %v628, 0.5
      %v707 = vmul.f32 %v631, 0.5
      %v708 = vmul.f32 %v636, 0.5
      %v709 = vmul.f32 %v639, 0.5
      %v710 = vmul.f32 %v644, 0.5
      %v711 = vmul.f32 %v647, 0.5
      %v712 = vmul.f32 %v652, 0.5
      %v713 = vmul.f32 %v655, 0.5
      %v714 = vmul.f32 %v660, 0.5
      %v715 = vmul.f32 %v663, 0.5
      %v716 = vmul.f32 %v668, 0.5
      %v717 = vmul.f32 %v671, 0.5
      %v718 = vmul.f32 %v676, 0.5
      %v719 = vmul.f32 %v679, 0.5
      %v720 = vmul.f32 %v684, 0.5
      %v721 = vmul.f32 %v687, 0.5
      %v722 = vmul.f32 %v564, %v564
      %v723 = vmul.f32 %v567, %v567
      %v724 = vmul.f32 %v572, %v572
      %v725 = vmul.f32 %v575, %v575
      %v726 = vmul.f32 %v580, %v580
      %v727 = vmul.f32 %v583, %v583
      %v728 = vmul.f32 %v588, %v588
      %v729 = vmul.f32 %v591, %v591
      %v730 = vmul.f32 %v596, %v596
      %v731 = vmul.f32 %v599, %v599
      %v732 = vmul.f32 %v604, %v604
      %v733 = vmul.f32 %v607, %v607
      %v734 = vmul.f32 %v612, %v612
      %v735 = vmul.f32 %v615, %v615
      %v736 = vmul.f32 %v620, %v620
      %v737 = vmul.f32 %v623, %v623
      %v738 = vmul.f32 %v628, %v628
      %v739 = vmul.f32 %v631, %v631
      %v740 = vmul.f32 %v636, %v636
      %v741 = vmul.f32 %v639, %v639
      %v742 = vmul.f32 %v644, %v644
      %v743 = vmul.f32 %v647, %v647
      %v744 = vmul.f32 %v652, %v652
      %v745 = vmul.f32 %v655, %v655
      %v746 = vmul.f32 %v660, %v660
      %v747 = vmul.f32 %v663, %v663
      %v748 = vmul.f32 %v668, %v668
      %v749 = vmul.f32 %v671, %v671
      %v750 = vmul.f32 %v676, %v676
      %v751 = vmul.f32 %v679, %v679
      %v752 = vmul.f32 %v684, %v684
      %v753 = vmul.f32 %v687, %v687
      %v754 = vmul.f32 %v722, %v564
      %v755 = vmul.f32 %v723, %v567
      %v756 = vmul.f32 %v724, %v572
      %v757 = vmul.f32 %v725, %v575
      %v758 = vmul.f32 %v726, %v580
      %v759 = vmul.f32 %v727, %v583
      %v760 = vmul.f32 %v728, %v588
      %v761 = vmul.f32 %v729, %v591
      %v762 = vmul.f32 %v730, %v596
      %v763 = vmul.f32 %v731, %v599
      %v764 = vmul.f32 %v732, %v604
      %v765 = vmul.f32 %v733, %v607
      %v766 = vmul.f32 %v734, %v612
      %v767 = vmul.f32 %v735, %v615
      %v768 = vmul.f32 %v736, %v620
      %v769 = vmul.f32 %v737, %v623
      %v770 = vmul.f32 %v738, %v628
      %v771 = vmul.f32 %v739, %v631
      %v772 = vmul.f32 %v740, %v636
      %v773 = vmul.f32 %v741, %v639
      %v774 = vmul.f32 %v742, %v644
      %v775 = vmul.f32 %v743, %v647
      %v776 = vmul.f32 %v744, %v652
      %v777 = vmul.f32 %v745, %v655
      %v778 = vmul.f32 %v746, %v660
      %v779 = vmul.f32 %v747, %v663
      %v780 = vmul.f32 %v748, %v668
      %v781 = vmul.f32 %v749, %v671
      %v782 = vmul.f32 %v750, %v676
      %v783 = vmul.f32 %v751, %v679
      %v784 = vmul.f32 %v752, %v684
      %v785 = vmul.f32 %v753, %v687
      %v786 = vmul.f32 %v754, 0.044715
      %v787 = vmul.f32 %v755, 0.044715
      %v788 = vmul.f32 %v756, 0.044715
      %v789 = vmul.f32 %v757, 0.044715
      %v790 = vmul.f32 %v758, 0.044715
      %v791 = vmul.f32 %v759, 0.044715
      %v792 = vmul.f32 %v760, 0.044715
      %v793 = vmul.f32 %v761, 0.044715
      %v794 = vmul.f32 %v762, 0.044715
      %v795 = vmul.f32 %v763, 0.044715
      %v796 = vmul.f32 %v764, 0.044715
      %v797 = vmul.f32 %v765, 0.044715
      %v798 = vmul.f32 %v766, 0.044715
      %v799 = vmul.f32 %v767, 0.044715
      %v800 = vmul.f32 %v768, 0.044715
      %v801 = vmul.f32 %v769, 0.044715
      %v802 = vmul.f32 %v770, 0.044715
      %v803 = vmul.f32 %v771, 0.044715
      %v804 = vmul.f32 %v772, 0.044715
      %v805 = vmul.f32 %v773, 0.044715
      %v806 = vmul.f32 %v774, 0.044715
      %v807 = vmul.f32 %v775, 0.044715
      %v808 = vmul.f32 %v776, 0.044715
      %v809 = vmul.f32 %v777, 0.044715
      %v810 = vmul.f32 %v778, 0.044715
      %v811 = vmul.f32 %v779, 0.044715
      %v812 = vmul.f32 %v780, 0.044715
      %v813 = vmul.f32 %v781, 0.044715
      %v814 = vmul.f32 %v782, 0.044715
      %v815 = vmul.f32 %v783, 0.044715
      %v816 = vmul.f32 %v784, 0.044715
      %v817 = vmul.f32 %v785, 0.044715
      %v818 = vadd.f32 %v564, %v786
      %v819 = vadd.f32 %v567, %v787
      %v820 = vadd.f32 %v572, %v788
      %v821 = vadd.f32 %v575, %v789
      %v822 = vadd.f32 %v580, %v790
      %v823 = vadd.f32 %v583, %v791
      %v824 = vadd.f32 %v588, %v792
      %v825 = vadd.f32 %v591, %v793
      %v826 = vadd.f32 %v596, %v794
      %v827 = vadd.f32 %v599, %v795
      %v828 = vadd.f32 %v604, %v796
      %v829 = vadd.f32 %v607, %v797
      %v830 = vadd.f32 %v612, %v798
      %v831 = vadd.f32 %v615, %v799
      %v832 = vadd.f32 %v620, %v800
      %v833 = vadd.f32 %v623, %v801
      %v834 = vadd.f32 %v628, %v802
      %v835 = vadd.f32 %v631, %v803
      %v836 = vadd.f32 %v636, %v804
      %v837 = vadd.f32 %v639, %v805
      %v838 = vadd.f32 %v644, %v806
      %v839 = vadd.f32 %v647, %v807
      %v840 = vadd.f32 %v652, %v808
      %v841 = vadd.f32 %v655, %v809
      %v842 = vadd.f32 %v660, %v810
      %v843 = vadd.f32 %v663, %v811
      %v844 = vadd.f32 %v668, %v812
      %v845 = vadd.f32 %v671, %v813
      %v846 = vadd.f32 %v676, %v814
      %v847 = vadd.f32 %v679, %v815
      %v848 = vadd.f32 %v684, %v816
      %v849 = vadd.f32 %v687, %v817
      %v850 = vmul.f32 %v818, 0.7978846
      %v851 = vmul.f32 %v819, 0.7978846
      %v852 = vmul.f32 %v820, 0.7978846
      %v853 = vmul.f32 %v821, 0.7978846
      %v854 = vmul.f32 %v822, 0.7978846
      %v855 = vmul.f32 %v823, 0.7978846
      %v856 = vmul.f32 %v824, 0.7978846
      %v857 = vmul.f32 %v825, 0.7978846
      %v858 = vmul.f32 %v826, 0.7978846
      %v859 = vmul.f32 %v827, 0.7978846
      %v860 = vmul.f32 %v828, 0.7978846
      %v861 = vmul.f32 %v829, 0.7978846
      %v862 = vmul.f32 %v830, 0.7978846
      %v863 = vmul.f32 %v831, 0.7978846
      %v864 = vmul.f32 %v832, 0.7978846
      %v865 = vmul.f32 %v833, 0.7978846
      %v866 = vmul.f32 %v834, 0.7978846
      %v867 = vmul.f32 %v835, 0.7978846
      %v868 = vmul.f32 %v836, 0.7978846
      %v869 = vmul.f32 %v837, 0.7978846
      %v870 = vmul.f32 %v838, 0.7978846
      %v871 = vmul.f32 %v839, 0.7978846
      %v872 = vmul.f32 %v840, 0.7978846
      %v873 = vmul.f32 %v841, 0.7978846
      %v874 = vmul.f32 %v842, 0.7978846
      %v875 = vmul.f32 %v843, 0.7978846
      %v876 = vmul.f32 %v844, 0.7978846
      %v877 = vmul.f32 %v845, 0.7978846
      %v878 = vmul.f32 %v846, 0.7978846
      %v879 = vmul.f32 %v847, 0.7978846
      %v880 = vmul.f32 %v848, 0.7978846
      %v881 = vmul.f32 %v849, 0.7978846
      %v882 = vtanh.pop %v850
      %v883 = vtanh.pop %v851
      %v884 = vtanh.pop %v852
      %v885 = vtanh.pop %v853
      %v886 = vtanh.pop %v854
      %v887 = vtanh.pop %v855
      %v888 = vtanh.pop %v856
      %v889 = vtanh.pop %v857
      %v890 = vtanh.pop %v858
      %v891 = vtanh.pop %v859
      %v892 = vtanh.pop %v860
      %v893 = vtanh.pop %v861
      %v894 = vtanh.pop %v862
      %v895 = vtanh.pop %v863
      %v896 = vtanh.pop %v864
      %v897 = vtanh.pop %v865
      %v898 = vtanh.pop %v866
      %v899 = vtanh.pop %v867
      %v900 = vtanh.pop %v868
      %v901 = vtanh.pop %v869
      %v902 = vtanh.pop %v870
      %v903 = vtanh.pop %v871
      %v904 = vtanh.pop %v872
      %v905 = vtanh.pop %v873
      %v906 = vtanh.pop %v874
      %v907 = vtanh.pop %v875
      %v908 = vtanh.pop %v876
      %v909 = vtanh.pop %v877
      %v910 = vtanh.pop %v878
      %v911 = vtanh.pop %v879
      %v912 = vtanh.pop %v880
      %v913 = vtanh.pop %v881
      %v914 = vadd.f32 %v882, 1.0
      %v915 = vadd.f32 %v883, 1.0
      %v916 = vadd.f32 %v884, 1.0
      %v917 = vadd.f32 %v885, 1.0
      %v918 = vadd.f32 %v886, 1.0
      %v919 = vadd.f32 %v887, 1.0
      %v920 = vadd.f32 %v888, 1.0
      %v921 = vadd.f32 %v889, 1.0
      %v922 = vadd.f32 %v890, 1.0
      %v923 = vadd.f32 %v891, 1.0
      %v924 = vadd.f32 %v892, 1.0
      %v925 = vadd.f32 %v893, 1.0
      %v926 = vadd.f32 %v894, 1.0
      %v927 = vadd.f32 %v895, 1.0
      %v928 = vadd.f32 %v896, 1.0
      %v929 = vadd.f32 %v897, 1.0
      %v930 = vadd.f32 %v898, 1.0
      %v931 = vadd.f32 %v899, 1.0
      %v932 = vadd.f32 %v900, 1.0
      %v933 = vadd.f32 %v901, 1.0
      %v934 = vadd.f32 %v902, 1.0
      %v935 = vadd.f32 %v903, 1.0
      %v936 = vadd.f32 %v904, 1.0
      %v937 = vadd.f32 %v905, 1.0
      %v938 = vadd.f32 %v906, 1.0
      %v939 = vadd.f32 %v907, 1.0
      %v940 = vadd.f32 %v908, 1.0
      %v941 = vadd.f32 %v909, 1.0
      %v942 = vadd.f32 %v910, 1.0
      %v943 = vadd.f32 %v911, 1.0
      %v944 = vadd.f32 %v912, 1.0
      %v945 = vadd.f32 %v913, 1.0
      %v946 = vmul.f32 %v690, %v914
      %v947 = vmul.f32 %v691, %v915
      %v948 = vmul.f32 %v692, %v916
      %v949 = vmul.f32 %v693, %v917
      %v950 = vmul.f32 %v694, %v918
      %v951 = vmul.f32 %v695, %v919
      %v952 = vmul.f32 %v696, %v920
      %v953 = vmul.f32 %v697, %v921
      %v954 = vmul.f32 %v698, %v922
      %v955 = vmul.f32 %v699, %v923
      %v956 = vmul.f32 %v700, %v924
      %v957 = vmul.f32 %v701, %v925
      %v958 = vmul.f32 %v702, %v926
      %v959 = vmul.f32 %v703, %v927
      %v960 = vmul.f32 %v704, %v928
      %v961 = vmul.f32 %v705, %v929
      %v962 = vmul.f32 %v706, %v930
      %v963 = vmul.f32 %v707, %v931
      %v964 = vmul.f32 %v708, %v932
      %v965 = vmul.f32 %v709, %v933
      %v966 = vmul.f32 %v710, %v934
      %v967 = vmul.f32 %v711, %v935
      %v968 = vmul.f32 %v712, %v936
      %v969 = vmul.f32 %v713, %v937
      %v970 = vmul.f32 %v714, %v938
      %v971 = vmul.f32 %v715, %v939
      %v972 = vmul.f32 %v716, %v940
      %v973 = vmul.f32 %v717, %v941
      %v974 = vmul.f32 %v718, %v942
      %v975 = vmul.f32 %v719, %v943
      %v976 = vmul.f32 %v720, %v944
      %v977 = vmul.f32 %v721, %v945
      %v978 = vld [vmem:[#allocation2] sm:$0xff]
      %v979 = vld [vmem:[#allocation2 + $0x8] sm:$0xff]
      %v980 = vld [vmem:[#allocation2 + $0x10] sm:$0xff]
      %v981 = vld [vmem:[#allocation2 + $0x18] sm:$0xff]
      %v982 = vld [vmem:[#allocation2 + $0x20] sm:$0xff]
      %v983 = vld [vmem:[#allocation2 + $0x28] sm:$0xff]
      %v984 = vld [vmem:[#allocation2 + $0x30] sm:$0xff]
      %v985 = vld [vmem:[#allocation2 + $0x38] sm:$0xff]
      %v986 = vld [vmem:[#allocation2 + $0x40] sm:$0xff]
      %v987 = vld [vmem:[#allocation2 + $0x48] sm:$0xff]
      %v988 = vld [vmem:[#allocation2 + $0x50] sm:$0xff]
      %v989 = vld [vmem:[#allocation2 + $0x58] sm:$0xff]
      %v990 = vld [vmem:[#allocation2 + $0x60] sm:$0xff]
      %v991 = vld [vmem:[#allocation2 + $0x68] sm:$0xff]
      %v992 = vld [vmem:[#allocation2 + $0x70] sm:$0xff]
      %v993 = vld [vmem:[#allocation2 + $0x78] sm:$0xff]
      %v994 = vld [vmem:[#allocation2 + $0x80] sm:$0xff]
      %v995 = vld [vmem:[#allocation2 + $0x88] sm:$0xff]
      %v996 = vld [vmem:[#allocation2 + $0x90] sm:$0xff]
      %v997 = vld [vmem:[#allocation2 + $0x98] sm:$0xff]
      %v998 = vld [vmem:[#allocation2 + $0xa0] sm:$0xff]
      %v999 = vld [vmem:[#allocation2 + $0xa8] sm:$0xff]
      %v1000 = vld [vmem:[#allocation2 + $0xb0] sm:$0xff]
      %v1001 = vld [vmem:[#allocation2 + $0xb8] sm:$0xff]
      %v1002 = vld [vmem:[#allocation2 + $0xc0] sm:$0xff]
      %v1003 = vld [vmem:[#allocation2 + $0xc8] sm:$0xff]
      %v1004 = vld [vmem:[#allocation2 + $0xd0] sm:$0xff]
      %v1005 = vld [vmem:[#allocation2 + $0xd8] sm:$0xff]
      %v1006 = vld [vmem:[#allocation2 + $0xe0] sm:$0xff]
      %v1007 = vld [vmem:[#allocation2 + $0xe8] sm:$0xff]
      %v1008 = vld [vmem:[#allocation2 + $0xf0] sm:$0xff]
      %v1009 = vld [vmem:[#allocation2 + $0xf8] sm:$0xff]
      %v1010 = vpack.c.bf16 %v947, %v946
      %v1011 = vpack.c.bf16 %v949, %v948
      %v1012 = vpack.c.bf16 %v951, %v950
      %v1013 = vpack.c.bf16 %v953, %v952
      %v1014 = vpack.c.bf16 %v955, %v954
      %v1015 = vpack.c.bf16 %v957, %v956
      %v1016 = vpack.c.bf16 %v959, %v958
      %v1017 = vpack.c.bf16 %v961, %v960
      %v1018 = vpack.c.bf16 %v963, %v962
      %v1019 = vpack.c.bf16 %v965, %v964
      %v1020 = vpack.c.bf16 %v967, %v966
      %v1021 = vpack.c.bf16 %v969, %v968
      %v1022 = vpack.c.bf16 %v971, %v970
      %v1023 = vpack.c.bf16 %v973, %v972
      %v1024 = vpack.c.bf16 %v975, %v974
      %v1025 = vpack.c.bf16 %v977, %v976
      %v1026 = vld [vmem:[%s285] sm:$0xf]
      %v1027 = vld [vmem:[%s285 + $0x4] sm:$0xf]
      %v1028 = vld [vmem:[%s285 + $0x8] sm:$0xf]
      %v1029 = vld [vmem:[%s285 + $0xc] sm:$0xf]
      %v1030 = vld [vmem:[%s285 + $0x10] sm:$0xf]
      %v1031 = vld [vmem:[%s285 + $0x14] sm:$0xf]
      %v1032 = vld [vmem:[%s285 + $0x18] sm:$0xf]
      %v1033 = vld [vmem:[%s285 + $0x1c] sm:$0xf]
      %v1034 = vld [vmem:[%s285 + $0x20] sm:$0xf]
      %v1035 = vld [vmem:[%s285 + $0x24] sm:$0xf]
      %v1036 = vld [vmem:[%s285 + $0x28] sm:$0xf]
      %v1037 = vld [vmem:[%s285 + $0x2c] sm:$0xf]
      %v1038 = vld [vmem:[%s285 + $0x30] sm:$0xf]
      %v1039 = vld [vmem:[%s285 + $0x34] sm:$0xf]
      %v1040 = vld [vmem:[%s285 + $0x38] sm:$0xf]
      %v1041 = vld [vmem:[%s285 + $0x3c] sm:$0xf]
      %v1058 = vunpack.c.l.b16 %v1026
      %v1059 = vunpack.c.l.b16 %v1027
      %v1060 = vunpack.c.l.b16 %v1028
      %v1061 = vunpack.c.l.b16 %v1029
      %v1062 = vunpack.c.l.b16 %v1030
      %v1063 = vunpack.c.l.b16 %v1031
      %v1064 = vunpack.c.l.b16 %v1032
      %v1065 = vunpack.c.l.b16 %v1033
      %v1066 = vunpack.c.l.b16 %v1034
      %v1067 = vunpack.c.l.b16 %v1035
      %v1068 = vunpack.c.l.b16 %v1036
      %v1069 = vunpack.c.l.b16 %v1037
      %v1070 = vunpack.c.l.b16 %v1038
      %v1071 = vunpack.c.l.b16 %v1039
      %v1072 = vunpack.c.l.b16 %v1040
      %v1073 = vunpack.c.l.b16 %v1041
      %v1074 = vpack.c.b16 %v1059, %v1058
      %v1075 = vpack.c.b16 %v1061, %v1060
      %v1076 = vpack.c.b16 %v1063, %v1062
      %v1077 = vpack.c.b16 %v1065, %v1064
      %v1078 = vpack.c.b16 %v1067, %v1066
      %v1079 = vpack.c.b16 %v1069, %v1068
      %v1080 = vpack.c.b16 %v1071, %v1070
      %v1081 = vpack.c.b16 %v1073, %v1072
      %1090 = vmatprep.subr.bf16.mxu0 0
      %1091 = vmatpush1.bf16.msra.mxu0 %v1081
      %1092 = vmatprep.subr.bf16.mxu0 0
      %1093 = vmatpush1.bf16.msra.mxu0 %v1080
      %1094 = vmatprep.subr.bf16.mxu0 0
      %1095 = vmatpush1.bf16.msra.mxu0 %v1079
      %1096 = vmatprep.subr.bf16.mxu0 0
      %1097 = vmatpush1.bf16.msra.mxu0 %v1078
      %1098 = vmatprep.subr.bf16.mxu0 0
      %1099 = vmatpush1.bf16.msra.mxu0 %v1077
      %1100 = vmatprep.subr.bf16.mxu0 0
      %1101 = vmatpush1.bf16.msra.mxu0 %v1076
      %1102 = vmatprep.subr.bf16.mxu0 0
      %1103 = vmatpush1.bf16.msra.mxu0 %v1075
      %1104 = vmatprep.subr.bf16.mxu0 0
      %1105 = vmatpush1.bf16.msra.mxu0 %v1074
      %1106 = vmatprep.subr.bf16.mxu0 0
      %1107 = vmatpush2.bf16.msra.mxu0 0
      %1108 = vmatprep.subr.bf16.mxu0 0
      %1109 = vmatpush2.bf16.msra.mxu0 0
      %1110 = vmatprep.subr.bf16.mxu0 0
      %1111 = vmatpush2.bf16.msra.mxu0 0
      %1112 = vmatprep.subr.bf16.mxu0 0
      %1113 = vmatpush2.bf16.msra.mxu0 0
      %1114 = vmatprep.subr.bf16.mxu0 0
      %1115 = vmatpush2.bf16.msra.mxu0 0
      %1116 = vmatprep.subr.bf16.mxu0 0
      %1117 = vmatpush2.bf16.msra.mxu0 0
      %1118 = vmatprep.subr.bf16.mxu0 0
      %1119 = vmatpush2.bf16.msra.mxu0 0
      %1120 = vmatprep.subr.bf16.mxu0 0
      %1121 = vmatpush2.bf16.msra.mxu0 0
      %1122 = vmatprep.mubr.bf16.mxu0 0
      %1123 = vmatmul.mubr.bf16.gmra.mxu0 %v1010
      %v1124 = vpop.f32.mrf.mxu0
      %v1125 = vadd.f32 0.0, %v1124
      %v1126 = vpop.f32.mrf.mxu0
      %v1127 = vpop.f32.mrf.mxu0
      %v1128 = vadd.f32 0.0, %v1127
      %v1129 = vpop.f32.mrf.mxu0
      %1130 = vmatprep.mubr.bf16.mxu0 0
      %1131 = vmatmul.mubr.bf16.gmra.mxu0 %v1011
      %v1132 = vpop.f32.mrf.mxu0
      %v1133 = vadd.f32 0.0, %v1132
      %v1134 = vpop.f32.mrf.mxu0
      %v1135 = vpop.f32.mrf.mxu0
      %v1136 = vadd.f32 0.0, %v1135
      %v1137 = vpop.f32.mrf.mxu0
      %1138 = vmatprep.mubr.bf16.mxu0 0
      %1139 = vmatmul.mubr.bf16.gmra.mxu0 %v1012
      %v1140 = vpop.f32.mrf.mxu0
      %v1141 = vadd.f32 0.0, %v1140
      %v1142 = vpop.f32.mrf.mxu0
      %v1143 = vpop.f32.mrf.mxu0
      %v1144 = vadd.f32 0.0, %v1143
      %v1145 = vpop.f32.mrf.mxu0
      %1146 = vmatprep.mubr.bf16.mxu0 0
      %1147 = vmatmul.mubr.bf16.gmra.mxu0 %v1013
      %v1148 = vpop.f32.mrf.mxu0
      %v1149 = vadd.f32 0.0, %v1148
      %v1150 = vpop.f32.mrf.mxu0
      %v1151 = vpop.f32.mrf.mxu0
      %v1152 = vadd.f32 0.0, %v1151
      %v1153 = vpop.f32.mrf.mxu0
      %1154 = vmatprep.mubr.bf16.mxu0 0
      %1155 = vmatmul.mubr.bf16.gmra.mxu0 %v1014
      %v1156 = vpop.f32.mrf.mxu0
      %v1157 = vadd.f32 0.0, %v1156
      %v1158 = vpop.f32.mrf.mxu0
      %v1159 = vpop.f32.mrf.mxu0
      %v1160 = vadd.f32 0.0, %v1159
      %v1161 = vpop.f32.mrf.mxu0
      %1162 = vmatprep.mubr.bf16.mxu0 0
      %1163 = vmatmul.mubr.bf16.gmra.mxu0 %v1015
      %v1164 = vpop.f32.mrf.mxu0
      %v1165 = vadd.f32 0.0, %v1164
      %v1166 = vpop.f32.mrf.mxu0
      %v1167 = vpop.f32.mrf.mxu0
      %v1168 = vadd.f32 0.0, %v1167
      %v1169 = vpop.f32.mrf.mxu0
      %1170 = vmatprep.mubr.bf16.mxu0 0
      %1171 = vmatmul.mubr.bf16.gmra.mxu0 %v1016
      %v1172 = vpop.f32.mrf.mxu0
      %v1173 = vadd.f32 0.0, %v1172
      %v1174 = vpop.f32.mrf.mxu0
      %v1175 = vpop.f32.mrf.mxu0
      %v1176 = vadd.f32 0.0, %v1175
      %v1177 = vpop.f32.mrf.mxu0
      %1178 = vmatprep.mubr.bf16.mxu0 0
      %1179 = vmatmul.mubr.bf16.gmra.mxu0 %v1017
      %v1180 = vpop.f32.mrf.mxu0
      %v1181 = vadd.f32 0.0, %v1180
      %v1182 = vpop.f32.mrf.mxu0
      %v1183 = vpop.f32.mrf.mxu0
      %v1184 = vadd.f32 0.0, %v1183
      %v1185 = vpop.f32.mrf.mxu0
      %1186 = vmatprep.mubr.bf16.mxu0 0
      %1187 = vmatmul.mubr.bf16.gmra.mxu0 %v1018
      %v1188 = vpop.f32.mrf.mxu0
      %v1189 = vadd.f32 0.0, %v1188
      %v1190 = vpop.f32.mrf.mxu0
      %v1191 = vpop.f32.mrf.mxu0
      %v1192 = vadd.f32 0.0, %v1191
      %v1193 = vpop.f32.mrf.mxu0
      %1194 = vmatprep.mubr.bf16.mxu0 0
      %1195 = vmatmul.mubr.bf16.gmra.mxu0 %v1019
      %v1196 = vpop.f32.mrf.mxu0
      %v1197 = vadd.f32 0.0, %v1196
      %v1198 = vpop.f32.mrf.mxu0
      %v1199 = vpop.f32.mrf.mxu0
      %v1200 = vadd.f32 0.0, %v1199
      %v1201 = vpop.f32.mrf.mxu0
      %1202 = vmatprep.mubr.bf16.mxu0 0
      %1203 = vmatmul.mubr.bf16.gmra.mxu0 %v1020
      %v1204 = vpop.f32.mrf.mxu0
      %v1205 = vadd.f32 0.0, %v1204
      %v1206 = vpop.f32.mrf.mxu0
      %v1207 = vpop.f32.mrf.mxu0
      %v1208 = vadd.f32 0.0, %v1207
      %v1209 = vpop.f32.mrf.mxu0
      %1210 = vmatprep.mubr.bf16.mxu0 0
      %1211 = vmatmul.mubr.bf16.gmra.mxu0 %v1021
      %v1212 = vpop.f32.mrf.mxu0
      %v1213 = vadd.f32 0.0, %v1212
      %v1214 = vpop.f32.mrf.mxu0
      %v1215 = vpop.f32.mrf.mxu0
      %v1216 = vadd.f32 0.0, %v1215
      %v1217 = vpop.f32.mrf.mxu0
      %1218 = vmatprep.mubr.bf16.mxu0 0
      %1219 = vmatmul.mubr.bf16.gmra.mxu0 %v1022
      %v1220 = vpop.f32.mrf.mxu0
      %v1221 = vadd.f32 0.0, %v1220
      %v1222 = vpop.f32.mrf.mxu0
      %v1223 = vpop.f32.mrf.mxu0
      %v1224 = vadd.f32 0.0, %v1223
      %v1225 = vpop.f32.mrf.mxu0
      %1226 = vmatprep.mubr.bf16.mxu0 0
      %1227 = vmatmul.mubr.bf16.gmra.mxu0 %v1023
      %v1228 = vpop.f32.mrf.mxu0
      %v1229 = vadd.f32 0.0, %v1228
      %v1230 = vpop.f32.mrf.mxu0
      %v1231 = vpop.f32.mrf.mxu0
      %v1232 = vadd.f32 0.0, %v1231
      %v1233 = vpop.f32.mrf.mxu0
      %1234 = vmatprep.mubr.bf16.mxu0 0
      %1235 = vmatmul.mubr.bf16.gmra.mxu0 %v1024
      %v1236 = vpop.f32.mrf.mxu0
      %v1237 = vadd.f32 0.0, %v1236
      %v1238 = vpop.f32.mrf.mxu0
      %v1239 = vpop.f32.mrf.mxu0
      %v1240 = vadd.f32 0.0, %v1239
      %v1241 = vpop.f32.mrf.mxu0
      %1242 = vmatprep.mubr.bf16.mxu0 0
      %1243 = vmatmul.mubr.bf16.gmra.mxu0 %v1025
      %v1244 = vpop.f32.mrf.mxu0
      %v1245 = vadd.f32 0.0, %v1244
      %v1246 = vpop.f32.mrf.mxu0
      %v1247 = vpop.f32.mrf.mxu0
      %v1248 = vadd.f32 0.0, %v1247
      %v1249 = vpop.f32.mrf.mxu0
      %1250 = vdwg.mxu0
      %v1251 = vadd.f32 %v978, %v1125
      %v1252 = vadd.f32 %v979, %v1128
      %v1253 = vadd.f32 %v980, %v1133
      %v1254 = vadd.f32 %v981, %v1136
      %v1255 = vadd.f32 %v982, %v1141
      %v1256 = vadd.f32 %v983, %v1144
      %v1257 = vadd.f32 %v984, %v1149
      %v1258 = vadd.f32 %v985, %v1152
      %v1259 = vadd.f32 %v986, %v1157
      %v1260 = vadd.f32 %v987, %v1160
      %v1261 = vadd.f32 %v988, %v1165
      %v1262 = vadd.f32 %v989, %v1168
      %v1263 = vadd.f32 %v990, %v1173
      %v1264 = vadd.f32 %v991, %v1176
      %v1265 = vadd.f32 %v992, %v1181
      %v1266 = vadd.f32 %v993, %v1184
      %v1267 = vadd.f32 %v994, %v1189
      %v1268 = vadd.f32 %v995, %v1192
      %v1269 = vadd.f32 %v996, %v1197
      %v1270 = vadd.f32 %v997, %v1200
      %v1271 = vadd.f32 %v998, %v1205
      %v1272 = vadd.f32 %v999, %v1208
      %v1273 = vadd.f32 %v1000, %v1213
      %v1274 = vadd.f32 %v1001, %v1216
      %v1275 = vadd.f32 %v1002, %v1221
      %v1276 = vadd.f32 %v1003, %v1224
      %v1277 = vadd.f32 %v1004, %v1229
      %v1278 = vadd.f32 %v1005, %v1232
      %v1279 = vadd.f32 %v1006, %v1237
      %v1280 = vadd.f32 %v1007, %v1240
      %v1281 = vadd.f32 %v1008, %v1245
      %v1282 = vadd.f32 %v1009, %v1248
      %1283 = vst [vmem:[#allocation2] sm:$0xff] %v1251
      %1284 = vst [vmem:[#allocation2 + $0x8] sm:$0xff] %v1252
      %1285 = vst [vmem:[#allocation2 + $0x10] sm:$0xff] %v1253
      %1286 = vst [vmem:[#allocation2 + $0x18] sm:$0xff] %v1254
      %1287 = vst [vmem:[#allocation2 + $0x20] sm:$0xff] %v1255
      %1288 = vst [vmem:[#allocation2 + $0x28] sm:$0xff] %v1256
      %1289 = vst [vmem:[#allocation2 + $0x30] sm:$0xff] %v1257
      %1290 = vst [vmem:[#allocation2 + $0x38] sm:$0xff] %v1258
      %1291 = vst [vmem:[#allocation2 + $0x40] sm:$0xff] %v1259
      %1292 = vst [vmem:[#allocation2 + $0x48] sm:$0xff] %v1260
      %1293 = vst [vmem:[#allocation2 + $0x50] sm:$0xff] %v1261
      %1294 = vst [vmem:[#allocation2 + $0x58] sm:$0xff] %v1262
      %1295 = vst [vmem:[#allocation2 + $0x60] sm:$0xff] %v1263
      %1296 = vst [vmem:[#allocation2 + $0x68] sm:$0xff] %v1264
      %1297 = vst [vmem:[#allocation2 + $0x70] sm:$0xff] %v1265
      %1298 = vst [vmem:[#allocation2 + $0x78] sm:$0xff] %v1266
      %1299 = vst [vmem:[#allocation2 + $0x80] sm:$0xff] %v1267
      %1300 = vst [vmem:[#allocation2 + $0x88] sm:$0xff] %v1268
      %1301 = vst [vmem:[#allocation2 + $0x90] sm:$0xff] %v1269
      %1302 = vst [vmem:[#allocation2 + $0x98] sm:$0xff] %v1270
      %1303 = vst [vmem:[#allocation2 + $0xa0] sm:$0xff] %v1271
      %1304 = vst [vmem:[#allocation2 + $0xa8] sm:$0xff] %v1272
      %1305 = vst [vmem:[#allocation2 + $0xb0] sm:$0xff] %v1273
      %1306 = vst [vmem:[#allocation2 + $0xb8] sm:$0xff] %v1274
      %1307 = vst [vmem:[#allocation2 + $0xc0] sm:$0xff] %v1275
      %1308 = vst [vmem:[#allocation2 + $0xc8] sm:$0xff] %v1276
      %1309 = vst [vmem:[#allocation2 + $0xd0] sm:$0xff] %v1277
      %1310 = vst [vmem:[#allocation2 + $0xd8] sm:$0xff] %v1278
      %1311 = vst [vmem:[#allocation2 + $0xe0] sm:$0xff] %v1279
      %1312 = vst [vmem:[#allocation2 + $0xe8] sm:$0xff] %v1280
      %1313 = vst [vmem:[#allocation2 + $0xf0] sm:$0xff] %v1281
      %1314 = vst [vmem:[#allocation2 + $0xf8] sm:$0xff] %v1282
      // Predicated region
      $region45: #{mlp_forward.1} parent=39 // pred_check
        %p1315 = pneg %p294
      $region46: #{mlp_forward.1} parent=39 // pred_check_branch
        %1317 = sbr.rel (%p1315) target = $region48
      $region47: #{mlp_forward.1} parent=39 // pred_region
        %v1318 = vld [vmem:[#allocation2] sm:$0xff]
        %v1319 = vld [vmem:[#allocation2 + $0x8] sm:$0xff]
        %v1320 = vld [vmem:[#allocation2 + $0x10] sm:$0xff]
        %v1321 = vld [vmem:[#allocation2 + $0x18] sm:$0xff]
        %v1322 = vld [vmem:[#allocation2 + $0x20] sm:$0xff]
        %v1323 = vld [vmem:[#allocation2 + $0x28] sm:$0xff]
        %v1324 = vld [vmem:[#allocation2 + $0x30] sm:$0xff]
        %v1325 = vld [vmem:[#allocation2 + $0x38] sm:$0xff]
        %v1326 = vld [vmem:[#allocation2 + $0x40] sm:$0xff]
        %v1327 = vld [vmem:[#allocation2 + $0x48] sm:$0xff]
        %v1328 = vld [vmem:[#allocation2 + $0x50] sm:$0xff]
        %v1329 = vld [vmem:[#allocation2 + $0x58] sm:$0xff]
        %v1330 = vld [vmem:[#allocation2 + $0x60] sm:$0xff]
        %v1331 = vld [vmem:[#allocation2 + $0x68] sm:$0xff]
        %v1332 = vld [vmem:[#allocation2 + $0x70] sm:$0xff]
        %v1333 = vld [vmem:[#allocation2 + $0x78] sm:$0xff]
        %v1334 = vld [vmem:[#allocation2 + $0x80] sm:$0xff]
        %v1335 = vld [vmem:[#allocation2 + $0x88] sm:$0xff]
        %v1336 = vld [vmem:[#allocation2 + $0x90] sm:$0xff]
        %v1337 = vld [vmem:[#allocation2 + $0x98] sm:$0xff]
        %v1338 = vld [vmem:[#allocation2 + $0xa0] sm:$0xff]
        %v1339 = vld [vmem:[#allocation2 + $0xa8] sm:$0xff]
        %v1340 = vld [vmem:[#allocation2 + $0xb0] sm:$0xff]
        %v1341 = vld [vmem:[#allocation2 + $0xb8] sm:$0xff]
        %v1342 = vld [vmem:[#allocation2 + $0xc0] sm:$0xff]
        %v1343 = vld [vmem:[#allocation2 + $0xc8] sm:$0xff]
        %v1344 = vld [vmem:[#allocation2 + $0xd0] sm:$0xff]
        %v1345 = vld [vmem:[#allocation2 + $0xd8] sm:$0xff]
        %v1346 = vld [vmem:[#allocation2 + $0xe0] sm:$0xff]
        %v1347 = vld [vmem:[#allocation2 + $0xe8] sm:$0xff]
        %v1348 = vld [vmem:[#allocation2 + $0xf0] sm:$0xff]
        %v1349 = vld [vmem:[#allocation2 + $0xf8] sm:$0xff]
        %v1350 = vld [vmem:[%s4] sm:$0x1]
        %v1352 = vlaneseq
        %v1353 = vshrl.u32 %v1352, 7
        %v1354 = vsub.s32 0, %v1353
        %v1355 = vrot.slane %v1350, %v1354
        %v1357 = vadd.f32 %v1318, %v1355
        %v1358 = vadd.f32 %v1319, %v1355
        %v1359 = vadd.f32 %v1320, %v1355
        %v1360 = vadd.f32 %v1321, %v1355
        %v1361 = vadd.f32 %v1322, %v1355
        %v1362 = vadd.f32 %v1323, %v1355
        %v1363 = vadd.f32 %v1324, %v1355
        %v1364 = vadd.f32 %v1325, %v1355
        %v1365 = vadd.f32 %v1326, %v1355
        %v1366 = vadd.f32 %v1327, %v1355
        %v1367 = vadd.f32 %v1328, %v1355
        %v1368 = vadd.f32 %v1329, %v1355
        %v1369 = vadd.f32 %v1330, %v1355
        %v1370 = vadd.f32 %v1331, %v1355
        %v1371 = vadd.f32 %v1332, %v1355
        %v1372 = vadd.f32 %v1333, %v1355
        %v1373 = vadd.f32 %v1334, %v1355
        %v1374 = vadd.f32 %v1335, %v1355
        %v1375 = vadd.f32 %v1336, %v1355
        %v1376 = vadd.f32 %v1337, %v1355
        %v1377 = vadd.f32 %v1338, %v1355
        %v1378 = vadd.f32 %v1339, %v1355
        %v1379 = vadd.f32 %v1340, %v1355
        %v1380 = vadd.f32 %v1341, %v1355
        %v1381 = vadd.f32 %v1342, %v1355
        %v1382 = vadd.f32 %v1343, %v1355
        %v1383 = vadd.f32 %v1344, %v1355
        %v1384 = vadd.f32 %v1345, %v1355
        %v1385 = vadd.f32 %v1346, %v1355
        %v1386 = vadd.f32 %v1347, %v1355
        %v1387 = vadd.f32 %v1348, %v1355
        %v1388 = vadd.f32 %v1349, %v1355
        %1389 = vst [vmem:[%s291] sm:$0xff] %v1357
        %1390 = vst [vmem:[%s291 + $0x8] sm:$0xff] %v1358
        %1391 = vst [vmem:[%s291 + $0x10] sm:$0xff] %v1359
        %1392 = vst [vmem:[%s291 + $0x18] sm:$0xff] %v1360
        %1393 = vst [vmem:[%s291 + $0x20] sm:$0xff] %v1361
        %1394 = vst [vmem:[%s291 + $0x28] sm:$0xff] %v1362
        %1395 = vst [vmem:[%s291 + $0x30] sm:$0xff] %v1363
        %1396 = vst [vmem:[%s291 + $0x38] sm:$0xff] %v1364
        %1397 = vst [vmem:[%s291 + $0x40] sm:$0xff] %v1365
        %1398 = vst [vmem:[%s291 + $0x48] sm:$0xff] %v1366
        %1399 = vst [vmem:[%s291 + $0x50] sm:$0xff] %v1367
        %1400 = vst [vmem:[%s291 + $0x58] sm:$0xff] %v1368
        %1401 = vst [vmem:[%s291 + $0x60] sm:$0xff] %v1369
        %1402 = vst [vmem:[%s291 + $0x68] sm:$0xff] %v1370
        %1403 = vst [vmem:[%s291 + $0x70] sm:$0xff] %v1371
        %1404 = vst [vmem:[%s291 + $0x78] sm:$0xff] %v1372
        %1405 = vst [vmem:[%s291 + $0x80] sm:$0xff] %v1373
        %1406 = vst [vmem:[%s291 + $0x88] sm:$0xff] %v1374
        %1407 = vst [vmem:[%s291 + $0x90] sm:$0xff] %v1375
        %1408 = vst [vmem:[%s291 + $0x98] sm:$0xff] %v1376
        %1409 = vst [vmem:[%s291 + $0xa0] sm:$0xff] %v1377
        %1410 = vst [vmem:[%s291 + $0xa8] sm:$0xff] %v1378
        %1411 = vst [vmem:[%s291 + $0xb0] sm:$0xff] %v1379
        %1412 = vst [vmem:[%s291 + $0xb8] sm:$0xff] %v1380
        %1413 = vst [vmem:[%s291 + $0xc0] sm:$0xff] %v1381
        %1414 = vst [vmem:[%s291 + $0xc8] sm:$0xff] %v1382
        %1415 = vst [vmem:[%s291 + $0xd0] sm:$0xff] %v1383
        %1416 = vst [vmem:[%s291 + $0xd8] sm:$0xff] %v1384
        %1417 = vst [vmem:[%s291 + $0xe0] sm:$0xff] %v1385
        %1418 = vst [vmem:[%s291 + $0xe8] sm:$0xff] %v1386
        %1419 = vst [vmem:[%s291 + $0xf0] sm:$0xff] %v1387
        %1420 = vst [vmem:[%s291 + $0xf8] sm:$0xff] %v1388
      $region48: #{mlp_forward.1} parent=39 // pred_fallthru
        _
      %s1421 = smul.u32 32, %s20
      %p1422 = scmp.lt.s32.totalorder %s1421, 63
      %s1423 = scalar_select %p1422, %s1421, 63
      %s1424 = smul.addr %s1423, 8
      %s1425 = scalar_lea.vmem %s5, %s1424
      // Predicated region
      $region49: #{mlp_forward.1} parent=39 // pred_check
        %p1426 = pneg %p171
      $region50: #{mlp_forward.1} parent=39 // pred_check_branch
        %1428 = sbr.rel (%p1426) target = $region52
      $region51: #{mlp_forward.1} parent=39 // pred_region
        %s1429 = smul.u32 32, %s20
      $region52: #{mlp_forward.1} parent=39 // pred_fallthru
        _
    $region40: #{mlp_forward.1} parent=5 // pred_fallthru
      _
    %p1430 = scmp.le.s32.totalorder 2, %s11
    // Predicated region
    $region53: #{mlp_forward.1} parent=5 // pred_check
      %p1431 = pneg %p1430
    $region54: #{mlp_forward.1} parent=5 // pred_check_branch
      %1433 = sbr.rel (%p1431) target = $region56
    $region55: #{mlp_forward.1} parent=5 // pred_region
      %s1434 = ssub.s32 %s11, 2
      // Predicated region
      $region57: #{mlp_forward.1} parent=55 // pred_check
        %p1435 = pneg %p177
      $region58: #{mlp_forward.1} parent=55 // pred_check_branch
        %1437 = sbr.rel (%p1435) target = $region60
      $region59: #{mlp_forward.1} parent=55 // pred_region
        %s1438 = smul.u32 32, %s22
        %p1439 = scmp.lt.s32.totalorder %s1438, 63
        %s1440 = scalar_select %p1439, %s1438, 63
        %s1441 = smul.addr %s1440, 8
        %s1442 = scalar_lea.vmem %s5, %s1441
      $region60: #{mlp_forward.1} parent=55 // pred_fallthru
        _
    $region56: #{mlp_forward.1} parent=5 // pred_fallthru
      _
  $region6: #{mlp_forward.1} parent=0 // loop_footer
    %s15 = sadd.s32 1, %s11
  $region7: #{mlp_forward.1} parent=0 // loop_footer_branch
    %10 = sbr.rel target = $region3
  $region8: #{mlp_forward.1} parent=0 // loop_exit
    _

</llo_original>
